<compile_context>
chip_gen: v7x
topology: tpu7x:2x2x1
jax: 0.10.0
libtpu: 0.0.40
codegen_flags: <defaults>
</compile_context>

<pallas_src>
import functools

import jax
import jax.numpy as jnp
from jax.experimental import pallas as pl
from jax.experimental.pallas import tpu as pltpu


def _round_up(n, m):
    return ((n + m - 1) // m) * m


def _vmem_capacity_bytes():
    try:
        return int(pltpu.get_tpu_info().vmem_capacity_bytes)
    except Exception:
        return 64 << 20            # conservative fallback (v7x per-TC VMEM)


def _rnn_kernel(num_layers, t_chunk, compute_dtype, *refs):
    """One grid step = one (batch tile, time chunk); FC head fused as epilogue."""
    if num_layers > 1:
        (x_ref, wih0_ref, wihr_ref, whh_ref, b_ref,
         fcw_ref, fcb_ref, out_ref, h_ref) = refs
    else:
        (x_ref, wih0_ref, whh_ref, b_ref,
         fcw_ref, fcb_ref, out_ref, h_ref) = refs
        wihr_ref = None

    TB = h_ref.shape[1]
    H_pad = h_ref.shape[2]
    C_pad = out_ref.shape[-1]
    rows = t_chunk * TB

    # Reset the recurrent state at the start of each batch tile's sequence.
    @pl.when(pl.program_id(1) == 0)
    def _():
        h_ref[...] = jnp.zeros_like(h_ref)

    xs = x_ref[...]                                  # (t_chunk, TB, D_pad)
    layer_in = xs.reshape(rows, xs.shape[-1])        # (rows, D_pad) compute_dtype

    for l in range(num_layers):                      # static unroll over layers
        w_ih = wih0_ref[...] if l == 0 else wihr_ref[l - 1]
        # Chunk-batched i2h GEMM with the folded bias added once (off the
        # serial dependence chain).
        pre_i = (jnp.dot(layer_in, w_ih, preferred_element_type=jnp.float32)
                 + b_ref[l])                         # (rows, H_pad) f32
        w_hh = whh_ref[l]                            # (H_pad, H_pad)

        h_f32 = h_ref[l]                             # one VMEM load per chunk
        h_cd = h_f32.astype(compute_dtype)
        outs = []
        for tau in range(t_chunk):                   # serial recurrence (static unroll)
            pre = (pre_i[tau * TB:(tau + 1) * TB]
                   + jnp.dot(h_cd, w_hh, preferred_element_type=jnp.float32))
            h_f32 = jnp.tanh(pre)                    # (TB, H_pad) f32
            h_cd = h_f32.astype(compute_dtype)
            outs.append(h_cd)
        h_ref[l] = h_f32                             # one VMEM store per chunk
        layer_in = jnp.concatenate(outs, axis=0)     # (rows, H_pad) compute_dtype

    # Fused Linear head: single lane-dense chunk-batched GEMM epilogue.
    logits = (jnp.dot(layer_in, fcw_ref[...], preferred_element_type=jnp.float32)
              + fcb_ref[...])                        # (rows, C_pad) f32
    out_ref[...] = logits.reshape(t_chunk, TB, C_pad).astype(out_ref.dtype)


def rnn_forward(x, params, num_layers, *, t_chunk=16, compute_dtype=jnp.float32):
    """x: (B, T, D_in) float32 -> (B, T, num_class) float32."""
    B, T, D = x.shape
    H = params["w_hh"].shape[-1]
    C = params["fc_w"].shape[-1]
    L = num_layers
    f32 = jnp.float32
    cd = jnp.dtype(compute_dtype)

    # ---- hardware-friendly padded sizes -------------------------------------
    B_pad = _round_up(B, 8)                       # f32 sublanes
    D_pad = _round_up(D, 128)                     # lanes
    H_pad = _round_up(H, 128)
    C_pad = _round_up(C, 128)
    t_chunk = max(1, min(t_chunk, T))
    T_pad = _round_up(T, t_chunk)

    # Batch tile: up to 128 rows per tile; larger B gives NB >= 2 so the
    # "parallel" batch axis can occupy both v7x TensorCores.
    TB = B_pad if B_pad <= 128 else 128
    B_pad = _round_up(B_pad, TB)
    NB = B_pad // TB
    NT = T_pad // t_chunk

    # ---- pad / layout / cast (fuses into one XLA copy; padding is exact) ----
    x_tm = jnp.zeros((T_pad, B_pad, D_pad), compute_dtype)
    x_tm = x_tm.at[:T, :B, :D].set(jnp.transpose(x, (1, 0, 2)).astype(compute_dtype))

    wih0 = jnp.zeros((D_pad, H_pad), compute_dtype)
    wih0 = wih0.at[:D, :H].set(params["w_ih0"].astype(compute_dtype))
    whh = jnp.zeros((L, H_pad, H_pad), compute_dtype)
    whh = whh.at[:, :H, :H].set(params["w_hh"].astype(compute_dtype))
    bias = jnp.zeros((L, 1, H_pad), f32)
    bias = bias.at[:, 0, :H].set(params["b_ih"] + params["b_hh"])   # folded biases
    fcw = jnp.zeros((H_pad, C_pad), compute_dtype)
    fcw = fcw.at[:H, :C].set(params["fc_w"].astype(compute_dtype))
    fcb = jnp.zeros((1, C_pad), f32).at[:, :C].set(params["fc_b"])

    operands = [x_tm, wih0]
    in_specs = [
        pl.BlockSpec((t_chunk, TB, D_pad), lambda bt, tt: (tt, bt, 0)),
        pl.BlockSpec((D_pad, H_pad), lambda bt, tt: (0, 0)),
    ]
    if L > 1:
        wihr = jnp.zeros((L - 1, H_pad, H_pad), compute_dtype)
        wihr = wihr.at[:, :H, :H].set(params["w_ih_rest"].astype(compute_dtype))
        operands.append(wihr)
        in_specs.append(pl.BlockSpec((L - 1, H_pad, H_pad), lambda bt, tt: (0, 0, 0)))
    operands += [whh, bias, fcw, fcb]
    in_specs += [
        pl.BlockSpec((L, H_pad, H_pad), lambda bt, tt: (0, 0, 0)),
        pl.BlockSpec((L, 1, H_pad), lambda bt, tt: (0, 0, 0)),
        pl.BlockSpec((H_pad, C_pad), lambda bt, tt: (0, 0)),
        pl.BlockSpec((1, C_pad), lambda bt, tt: (0, 0)),
    ]

    # ---- explicit VMEM budget (blocks are double-buffered by BlockSpec) -----
    w_bytes = ((D_pad * H_pad + max(L - 1, 0) * H_pad * H_pad
                + L * H_pad * H_pad + H_pad * C_pad) * cd.itemsize
               + (L * H_pad + C_pad) * 4)
    x_blk = t_chunk * TB * D_pad * cd.itemsize
    o_blk = t_chunk * TB * C_pad * 4
    scratch_bytes = L * TB * H_pad * 4
    live_acts = 3 * t_chunk * TB * H_pad * 4      # chunk activations (may spill)
    budget = 2 * (x_blk + o_blk + w_bytes) + scratch_bytes + live_acts + (4 << 20)
    cap_phys = _vmem_capacity_bytes()
    cap = max(32 << 20, cap_phys - max(cap_phys // 8, 8 << 20))   # ~12.5% headroom
    vmem_limit = int(min(max(budget, 32 << 20), cap))

    logits = pl.pallas_call(
        functools.partial(_rnn_kernel, L, t_chunk, compute_dtype),
        out_shape=jax.ShapeDtypeStruct((T_pad, B_pad, C_pad), f32),
        grid_spec=pltpu.PrefetchScalarGridSpec(
            num_scalar_prefetch=0,
            grid=(NB, NT),                         # batch tiles outer, time inner
            in_specs=in_specs,
            out_specs=pl.BlockSpec((t_chunk, TB, C_pad), lambda bt, tt: (tt, bt, 0)),
            scratch_shapes=[pltpu.VMEM((L, TB, H_pad), f32)],
        ),
        compiler_params=pltpu.CompilerParams(
            dimension_semantics=("parallel", "arbitrary"),   # recurrence only along time
            vmem_limit_bytes=vmem_limit),
    )(*operands)

    out = logits[:T, :B, :C]                      # strip padding
    return jnp.transpose(out, (1, 0, 2))          # (B, T, C), batch_first


def init_params(key, input_dim, hidden_dim, num_layers, num_class):
    """PyTorch-style uniform(-1/sqrt(H), 1/sqrt(H)) init; weights pre-transposed."""
    k = 1.0 / jnp.sqrt(jnp.float32(hidden_dim))
    keys = jax.random.split(key, 8)
    u = lambda kk, shp: jax.random.uniform(kk, shp, jnp.float32, -k, k)

    w_ih0 = u(keys[0], (input_dim, hidden_dim))                      # W_ih_0^T
    n_rest = max(num_layers - 1, 1)
    w_ih_rest = u(keys[1], (n_rest, hidden_dim, hidden_dim))         # W_ih_l^T, l>0
    w_hh = u(keys[2], (num_layers, hidden_dim, hidden_dim))          # W_hh_l^T
    b_ih = u(keys[3], (num_layers, hidden_dim))
    b_hh = u(keys[4], (num_layers, hidden_dim))
    fc_w = u(keys[5], (hidden_dim, num_class))                       # W_fc^T
    fc_b = u(keys[6], (1, num_class))
    return dict(w_ih0=w_ih0, w_ih_rest=w_ih_rest, w_hh=w_hh,
                b_ih=b_ih, b_hh=b_hh, fc_w=fc_w, fc_b=fc_b)


def rnn_reference(x, params, num_layers):
    """Pure-JAX reference matching torch.nn.RNN(batch_first=True) + Linear."""
    B, T, D = x.shape
    H = params["w_hh"].shape[-1]
    h = jnp.zeros((num_layers, B, H), jnp.float32)
    outs = []
    for t in range(T):
        inp = x[:, t, :]
        new_h = []
        for l in range(num_layers):
            w_ih = params["w_ih0"] if l == 0 else params["w_ih_rest"][l - 1]
            pre = (inp @ w_ih + h[l] @ params["w_hh"][l]
                   + params["b_ih"][l] + params["b_hh"][l])
            hn = jnp.tanh(pre)
            new_h.append(hn)
            inp = hn
        h = jnp.stack(new_h)
        outs.append(inp @ params["fc_w"] + params["fc_b"][0])
    return jnp.stack(outs, axis=1)


if __name__ == "__main__":
    B, T = 2, 8
    INPUT_DIM, HIDDEN_DIM, NUM_LAYERS, NUM_CLASS = 16, 32, 2, 10

    key = jax.random.PRNGKey(0)
    kx, kp = jax.random.split(key)
    x = jax.random.normal(kx, (B, T, INPUT_DIM), jnp.float32)
    params = init_params(kp, INPUT_DIM, HIDDEN_DIM, NUM_LAYERS, NUM_CLASS)

    ref = rnn_reference(x, params, NUM_LAYERS)

    # f32 matmul path: tight validation against the pure-JAX/PyTorch semantics.
    fwd_f32 = jax.jit(functools.partial(rnn_forward, num_layers=NUM_LAYERS,
                                        compute_dtype=jnp.float32))
    out_f32 = jax.block_until_ready(fwd_f32(x, params))
    assert out_f32.shape == (B, T, NUM_CLASS)
    assert jnp.allclose(out_f32, ref, atol=1e-4, rtol=1e-4), \
        float(jnp.max(jnp.abs(out_f32 - ref)))

    # bf16 matmul-input path (recommended for v6e/v7x MXU): loose tolerance.
    fwd_bf16 = jax.jit(functools.partial(rnn_forward, num_layers=NUM_LAYERS,
                                         compute_dtype=jnp.bfloat16))
    out_bf16 = jax.block_until_ready(fwd_bf16(x, params))
    assert out_bf16.shape == (B, T, NUM_CLASS)
    assert jnp.allclose(out_bf16, ref, atol=1e-1, rtol=1e-1), \
        float(jnp.max(jnp.abs(out_bf16 - ref)))

    print("KERNEL_OK")
</pallas_src>

<mosaic_0001>
module attributes {stable_mosaic.version = 11 : i64} {
  func.func @_rnn_kernel(%arg0: i32, %arg1: i32, %arg2: memref<8x8x128xf32, #tpu.memory_space<vmem>>, %arg3: memref<128x128xf32, #tpu.memory_space<vmem>>, %arg4: memref<1x128x128xf32, #tpu.memory_space<vmem>>, %arg5: memref<2x128x128xf32, #tpu.memory_space<vmem>>, %arg6: memref<2x1x128xf32, #tpu.memory_space<vmem>>, %arg7: memref<128x128xf32, #tpu.memory_space<vmem>>, %arg8: memref<1x128xf32, #tpu.memory_space<vmem>>, %arg9: memref<8x8x128xf32, #tpu.memory_space<vmem>>, %arg10: memref<2x8x128xf32, #tpu.memory_space<vmem>>) attributes {dimension_semantics = [#tpu.dimension_semantics<parallel>, #tpu.dimension_semantics<arbitrary>], iteration_bounds = array<i64: 1, 1>, scalar_prefetch = 0 : i64, scratch_operands = 1 : i64, tpu.core_type = #tpu.core_type<tc>, window_params = [{transform_indices = @transform_0, window_bounds = array<i64: 8, 8, 128>}, {pipeline_mode = #tpu.pipeline_mode<synchronous>, transform_indices = @transform_1, window_bounds = array<i64: 128, 128>}, {pipeline_mode = #tpu.pipeline_mode<synchronous>, transform_indices = @transform_2, window_bounds = array<i64: 1, 128, 128>}, {pipeline_mode = #tpu.pipeline_mode<synchronous>, transform_indices = @transform_3, window_bounds = array<i64: 2, 128, 128>}, {pipeline_mode = #tpu.pipeline_mode<synchronous>, transform_indices = @transform_4, window_bounds = array<i64: 2, 1, 128>}, {pipeline_mode = #tpu.pipeline_mode<synchronous>, transform_indices = @transform_5, window_bounds = array<i64: 128, 128>}, {pipeline_mode = #tpu.pipeline_mode<synchronous>, transform_indices = @transform_6, window_bounds = array<i64: 1, 128>}, {transform_indices = @transform_7, window_bounds = array<i64: 8, 8, 128>}]} {
    %c0_i32 = arith.constant 0 : i32
    %0 = arith.cmpi eq, %arg1, %c0_i32 : i32
    %1 = arith.extui %0 : i1 to i32
    %c0_i32_0 = arith.constant 0 : i32
    %2 = arith.cmpi ne, %1, %c0_i32_0 : i32
    scf.if %2 {
      %cst_56 = arith.constant 0.000000e+00 : f32
      %105 = vector.broadcast %cst_56 : f32 to vector<2x8x128xf32>
      %c0_57 = arith.constant 0 : index
      %c0_58 = arith.constant 0 : index
      %c0_59 = arith.constant 0 : index
      %106 = vector.load %arg10[%c0_57, %c0_58, %c0_59] : memref<2x8x128xf32, #tpu.memory_space<vmem>>, vector<2x8x128xf32>
      tpu.vector_store %arg10[%c0_57, %c0_58, %c0_59], %105 {strides = array<i32>} : memref<2x8x128xf32, #tpu.memory_space<vmem>>, vector<2x8x128xf32>,
    } else {
    }
    %c0 = arith.constant 0 : index
    %c0_1 = arith.constant 0 : index
    %c0_2 = arith.constant 0 : index
    %3 = vector.load %arg2[%c0, %c0_1, %c0_2] : memref<8x8x128xf32, #tpu.memory_space<vmem>>, vector<8x8x128xf32>
    %4 = vector.shape_cast %3 : vector<8x8x128xf32> to vector<64x128xf32>
    %c0_3 = arith.constant 0 : index
    %c0_4 = arith.constant 0 : index
    %5 = vector.load %arg3[%c0_3, %c0_4] : memref<128x128xf32, #tpu.memory_space<vmem>>, vector<128x128xf32>
    %cst = arith.constant dense<0.000000e+00> : vector<64x128xf32>
    %6 = tpu.matmul %4, %5, %cst {dimension_numbers = #tpu.dot_dimension_numbers<[1], [0], [0], [1], [0, 0, 1, 1], [], []>} : vector<64x128xf32>, vector<128x128xf32>, vector<64x128xf32> -> vector<64x128xf32>
    %c0_5 = arith.constant 0 : index
    %c0_6 = arith.constant 0 : index
    %c0_7 = arith.constant 0 : index
    %7 = vector.load %arg6[%c0_5, %c0_6, %c0_7] : memref<2x1x128xf32, #tpu.memory_space<vmem>>, vector<1x1x128xf32>
    %8 = vector.shape_cast %7 : vector<1x1x128xf32> to vector<1x128xf32>
    %9 = vector.broadcast %8 : vector<1x128xf32> to vector<64x128xf32>
    %10 = arith.addf %6, %9 : vector<64x128xf32>
    %c0_8 = arith.constant 0 : index
    %c0_9 = arith.constant 0 : index
    %c0_10 = arith.constant 0 : index
    %11 = vector.load %arg5[%c0_8, %c0_9, %c0_10] : memref<2x128x128xf32, #tpu.memory_space<vmem>>, vector<1x128x128xf32>
    %12 = vector.shape_cast %11 : vector<1x128x128xf32> to vector<128x128xf32>
    %c0_11 = arith.constant 0 : index
    %c0_12 = arith.constant 0 : index
    %c0_13 = arith.constant 0 : index
    %13 = vector.load %arg10[%c0_11, %c0_12, %c0_13] : memref<2x8x128xf32, #tpu.memory_space<vmem>>, vector<1x8x128xf32>
    %14 = vector.shape_cast %13 : vector<1x8x128xf32> to vector<8x128xf32>
    %15 = vector.extract_strided_slice %10 {offsets = [0, 0], sizes = [8, 128], strides = [1, 1]} : vector<64x128xf32> to vector<8x128xf32>
    %cst_14 = arith.constant dense<0.000000e+00> : vector<8x128xf32>
    %16 = tpu.matmul %14, %12, %cst_14 {dimension_numbers = #tpu.dot_dimension_numbers<[1], [0], [0], [1], [0, 0, 1, 1], [], []>} : vector<8x128xf32>, vector<128x128xf32>, vector<8x128xf32> -> vector<8x128xf32>
    %17 = arith.addf %15, %16 : vector<8x128xf32>
    %18 = math.tanh %17 : vector<8x128xf32>
    %19 = vector.extract_strided_slice %10 {offsets = [8, 0], sizes = [8, 128], strides = [1, 1]} : vector<64x128xf32> to vector<8x128xf32>
    %cst_15 = arith.constant dense<0.000000e+00> : vector<8x128xf32>
    %20 = tpu.matmul %18, %12, %cst_15 {dimension_numbers = #tpu.dot_dimension_numbers<[1], [0], [0], [1], [0, 0, 1, 1], [], []>} : vector<8x128xf32>, vector<128x128xf32>, vector<8x128xf32> -> vector<8x128xf32>
    %21 = arith.addf %19, %20 : vector<8x128xf32>
    %22 = math.tanh %21 : vector<8x128xf32>
    %23 = vector.extract_strided_slice %10 {offsets = [16, 0], sizes = [8, 128], strides = [1, 1]} : vector<64x128xf32> to vector<8x128xf32>
    %cst_16 = arith.constant dense<0.000000e+00> : vector<8x128xf32>
    %24 = tpu.matmul %22, %12, %cst_16 {dimension_numbers = #tpu.dot_dimension_numbers<[1], [0], [0], [1], [0, 0, 1, 1], [], []>} : vector<8x128xf32>, vector<128x128xf32>, vector<8x128xf32> -> vector<8x128xf32>
    %25 = arith.addf %23, %24 : vector<8x128xf32>
    %26 = math.tanh %25 : vector<8x128xf32>
    %27 = vector.extract_strided_slice %10 {offsets = [24, 0], sizes = [8, 128], strides = [1, 1]} : vector<64x128xf32> to vector<8x128xf32>
    %cst_17 = arith.constant dense<0.000000e+00> : vector<8x128xf32>
    %28 = tpu.matmul %26, %12, %cst_17 {dimension_numbers = #tpu.dot_dimension_numbers<[1], [0], [0], [1], [0, 0, 1, 1], [], []>} : vector<8x128xf32>, vector<128x128xf32>, vector<8x128xf32> -> vector<8x128xf32>
    %29 = arith.addf %27, %28 : vector<8x128xf32>
    %30 = math.tanh %29 : vector<8x128xf32>
    %31 = vector.extract_strided_slice %10 {offsets = [32, 0], sizes = [8, 128], strides = [1, 1]} : vector<64x128xf32> to vector<8x128xf32>
    %cst_18 = arith.constant dense<0.000000e+00> : vector<8x128xf32>
    %32 = tpu.matmul %30, %12, %cst_18 {dimension_numbers = #tpu.dot_dimension_numbers<[1], [0], [0], [1], [0, 0, 1, 1], [], []>} : vector<8x128xf32>, vector<128x128xf32>, vector<8x128xf32> -> vector<8x128xf32>
    %33 = arith.addf %31, %32 : vector<8x128xf32>
    %34 = math.tanh %33 : vector<8x128xf32>
    %35 = vector.extract_strided_slice %10 {offsets = [40, 0], sizes = [8, 128], strides = [1, 1]} : vector<64x128xf32> to vector<8x128xf32>
    %cst_19 = arith.constant dense<0.000000e+00> : vector<8x128xf32>
    %36 = tpu.matmul %34, %12, %cst_19 {dimension_numbers = #tpu.dot_dimension_numbers<[1], [0], [0], [1], [0, 0, 1, 1], [], []>} : vector<8x128xf32>, vector<128x128xf32>, vector<8x128xf32> -> vector<8x128xf32>
    %37 = arith.addf %35, %36 : vector<8x128xf32>
    %38 = math.tanh %37 : vector<8x128xf32>
    %39 = vector.extract_strided_slice %10 {offsets = [48, 0], sizes = [8, 128], strides = [1, 1]} : vector<64x128xf32> to vector<8x128xf32>
    %cst_20 = arith.constant dense<0.000000e+00> : vector<8x128xf32>
    %40 = tpu.matmul %38, %12, %cst_20 {dimension_numbers = #tpu.dot_dimension_numbers<[1], [0], [0], [1], [0, 0, 1, 1], [], []>} : vector<8x128xf32>, vector<128x128xf32>, vector<8x128xf32> -> vector<8x128xf32>
    %41 = arith.addf %39, %40 : vector<8x128xf32>
    %42 = math.tanh %41 : vector<8x128xf32>
    %43 = vector.extract_strided_slice %10 {offsets = [56, 0], sizes = [8, 128], strides = [1, 1]} : vector<64x128xf32> to vector<8x128xf32>
    %cst_21 = arith.constant dense<0.000000e+00> : vector<8x128xf32>
    %44 = tpu.matmul %42, %12, %cst_21 {dimension_numbers = #tpu.dot_dimension_numbers<[1], [0], [0], [1], [0, 0, 1, 1], [], []>} : vector<8x128xf32>, vector<128x128xf32>, vector<8x128xf32> -> vector<8x128xf32>
    %45 = arith.addf %43, %44 : vector<8x128xf32>
    %46 = math.tanh %45 : vector<8x128xf32>
    %c0_22 = arith.constant 0 : index
    %c0_23 = arith.constant 0 : index
    %c0_24 = arith.constant 0 : index
    %47 = vector.load %arg10[%c0_22, %c0_23, %c0_24] : memref<2x8x128xf32, #tpu.memory_space<vmem>>, vector<1x8x128xf32>
    %48 = vector.shape_cast %47 : vector<1x8x128xf32> to vector<8x128xf32>
    %49 = vector.shape_cast %46 : vector<8x128xf32> to vector<1x8x128xf32>
    tpu.vector_store %arg10[%c0_22, %c0_23, %c0_24], %49 {strides = array<i32>} : memref<2x8x128xf32, #tpu.memory_space<vmem>>, vector<1x8x128xf32>,
    %50 = tpu.concatenate %18, %22, %26, %30, %34, %38, %42, %46 in 0 : vector<8x128xf32>, vector<8x128xf32>, vector<8x128xf32>, vector<8x128xf32>, vector<8x128xf32>, vector<8x128xf32>, vector<8x128xf32>, vector<8x128xf32> -> vector<64x128xf32>
    %c0_25 = arith.constant 0 : index
    %c0_26 = arith.constant 0 : index
    %c0_27 = arith.constant 0 : index
    %51 = vector.load %arg4[%c0_25, %c0_26, %c0_27] : memref<1x128x128xf32, #tpu.memory_space<vmem>>, vector<1x128x128xf32>
    %52 = vector.shape_cast %51 : vector<1x128x128xf32> to vector<128x128xf32>
    %cst_28 = arith.constant dense<0.000000e+00> : vector<64x128xf32>
    %53 = tpu.matmul %50, %52, %cst_28 {dimension_numbers = #tpu.dot_dimension_numbers<[1], [0], [0], [1], [0, 0, 1, 1], [], []>} : vector<64x128xf32>, vector<128x128xf32>, vector<64x128xf32> -> vector<64x128xf32>
    %c1 = arith.constant 1 : index
    %c0_29 = arith.constant 0 : index
    %c0_30 = arith.constant 0 : index
    %54 = vector.load %arg6[%c1, %c0_29, %c0_30] : memref<2x1x128xf32, #tpu.memory_space<vmem>>, vector<1x1x128xf32>
    %55 = vector.shape_cast %54 : vector<1x1x128xf32> to vector<1x128xf32>
    %56 = vector.broadcast %55 : vector<1x128xf32> to vector<64x128xf32>
    %57 = arith.addf %53, %56 : vector<64x128xf32>
    %c1_31 = arith.constant 1 : index
    %c0_32 = arith.constant 0 : index
    %c0_33 = arith.constant 0 : index
    %58 = vector.load %arg5[%c1_31, %c0_32, %c0_33] : memref<2x128x128xf32, #tpu.memory_space<vmem>>, vector<1x128x128xf32>
    %59 = vector.shape_cast %58 : vector<1x128x128xf32> to vector<128x128xf32>
    %c1_34 = arith.constant 1 : index
    %c0_35 = arith.constant 0 : index
    %c0_36 = arith.constant 0 : index
    %60 = vector.load %arg10[%c1_34, %c0_35, %c0_36] : memref<2x8x128xf32, #tpu.memory_space<vmem>>, vector<1x8x128xf32>
    %61 = vector.shape_cast %60 : vector<1x8x128xf32> to vector<8x128xf32>
    %62 = vector.extract_strided_slice %57 {offsets = [0, 0], sizes = [8, 128], strides = [1, 1]} : vector<64x128xf32> to vector<8x128xf32>
    %cst_37 = arith.constant dense<0.000000e+00> : vector<8x128xf32>
    %63 = tpu.matmul %61, %59, %cst_37 {dimension_numbers = #tpu.dot_dimension_numbers<[1], [0], [0], [1], [0, 0, 1, 1], [], []>} : vector<8x128xf32>, vector<128x128xf32>, vector<8x128xf32> -> vector<8x128xf32>
    %64 = arith.addf %62, %63 : vector<8x128xf32>
    %65 = math.tanh %64 : vector<8x128xf32>
    %66 = vector.extract_strided_slice %57 {offsets = [8, 0], sizes = [8, 128], strides = [1, 1]} : vector<64x128xf32> to vector<8x128xf32>
    %cst_38 = arith.constant dense<0.000000e+00> : vector<8x128xf32>
    %67 = tpu.matmul %65, %59, %cst_38 {dimension_numbers = #tpu.dot_dimension_numbers<[1], [0], [0], [1], [0, 0, 1, 1], [], []>} : vector<8x128xf32>, vector<128x128xf32>, vector<8x128xf32> -> vector<8x128xf32>
    %68 = arith.addf %66, %67 : vector<8x128xf32>
    %69 = math.tanh %68 : vector<8x128xf32>
    %70 = vector.extract_strided_slice %57 {offsets = [16, 0], sizes = [8, 128], strides = [1, 1]} : vector<64x128xf32> to vector<8x128xf32>
    %cst_39 = arith.constant dense<0.000000e+00> : vector<8x128xf32>
    %71 = tpu.matmul %69, %59, %cst_39 {dimension_numbers = #tpu.dot_dimension_numbers<[1], [0], [0], [1], [0, 0, 1, 1], [], []>} : vector<8x128xf32>, vector<128x128xf32>, vector<8x128xf32> -> vector<8x128xf32>
    %72 = arith.addf %70, %71 : vector<8x128xf32>
    %73 = math.tanh %72 : vector<8x128xf32>
    %74 = vector.extract_strided_slice %57 {offsets = [24, 0], sizes = [8, 128], strides = [1, 1]} : vector<64x128xf32> to vector<8x128xf32>
    %cst_40 = arith.constant dense<0.000000e+00> : vector<8x128xf32>
    %75 = tpu.matmul %73, %59, %cst_40 {dimension_numbers = #tpu.dot_dimension_numbers<[1], [0], [0], [1], [0, 0, 1, 1], [], []>} : vector<8x128xf32>, vector<128x128xf32>, vector<8x128xf32> -> vector<8x128xf32>
    %76 = arith.addf %74, %75 : vector<8x128xf32>
    %77 = math.tanh %76 : vector<8x128xf32>
    %78 = vector.extract_strided_slice %57 {offsets = [32, 0], sizes = [8, 128], strides = [1, 1]} : vector<64x128xf32> to vector<8x128xf32>
    %cst_41 = arith.constant dense<0.000000e+00> : vector<8x128xf32>
    %79 = tpu.matmul %77, %59, %cst_41 {dimension_numbers = #tpu.dot_dimension_numbers<[1], [0], [0], [1], [0, 0, 1, 1], [], []>} : vector<8x128xf32>, vector<128x128xf32>, vector<8x128xf32> -> vector<8x128xf32>
    %80 = arith.addf %78, %79 : vector<8x128xf32>
    %81 = math.tanh %80 : vector<8x128xf32>
    %82 = vector.extract_strided_slice %57 {offsets = [40, 0], sizes = [8, 128], strides = [1, 1]} : vector<64x128xf32> to vector<8x128xf32>
    %cst_42 = arith.constant dense<0.000000e+00> : vector<8x128xf32>
    %83 = tpu.matmul %81, %59, %cst_42 {dimension_numbers = #tpu.dot_dimension_numbers<[1], [0], [0], [1], [0, 0, 1, 1], [], []>} : vector<8x128xf32>, vector<128x128xf32>, vector<8x128xf32> -> vector<8x128xf32>
    %84 = arith.addf %82, %83 : vector<8x128xf32>
    %85 = math.tanh %84 : vector<8x128xf32>
    %86 = vector.extract_strided_slice %57 {offsets = [48, 0], sizes = [8, 128], strides = [1, 1]} : vector<64x128xf32> to vector<8x128xf32>
    %cst_43 = arith.constant dense<0.000000e+00> : vector<8x128xf32>
    %87 = tpu.matmul %85, %59, %cst_43 {dimension_numbers = #tpu.dot_dimension_numbers<[1], [0], [0], [1], [0, 0, 1, 1], [], []>} : vector<8x128xf32>, vector<128x128xf32>, vector<8x128xf32> -> vector<8x128xf32>
    %88 = arith.addf %86, %87 : vector<8x128xf32>
    %89 = math.tanh %88 : vector<8x128xf32>
    %90 = vector.extract_strided_slice %57 {offsets = [56, 0], sizes = [8, 128], strides = [1, 1]} : vector<64x128xf32> to vector<8x128xf32>
    %cst_44 = arith.constant dense<0.000000e+00> : vector<8x128xf32>
    %91 = tpu.matmul %89, %59, %cst_44 {dimension_numbers = #tpu.dot_dimension_numbers<[1], [0], [0], [1], [0, 0, 1, 1], [], []>} : vector<8x128xf32>, vector<128x128xf32>, vector<8x128xf32> -> vector<8x128xf32>
    %92 = arith.addf %90, %91 : vector<8x128xf32>
    %93 = math.tanh %92 : vector<8x128xf32>
    %c1_45 = arith.constant 1 : index
    %c0_46 = arith.constant 0 : index
    %c0_47 = arith.constant 0 : index
    %94 = vector.load %arg10[%c1_45, %c0_46, %c0_47] : memref<2x8x128xf32, #tpu.memory_space<vmem>>, vector<1x8x128xf32>
    %95 = vector.shape_cast %94 : vector<1x8x128xf32> to vector<8x128xf32>
    %96 = vector.shape_cast %93 : vector<8x128xf32> to vector<1x8x128xf32>
    tpu.vector_store %arg10[%c1_45, %c0_46, %c0_47], %96 {strides = array<i32>} : memref<2x8x128xf32, #tpu.memory_space<vmem>>, vector<1x8x128xf32>,
    %97 = tpu.concatenate %65, %69, %73, %77, %81, %85, %89, %93 in 0 : vector<8x128xf32>, vector<8x128xf32>, vector<8x128xf32>, vector<8x128xf32>, vector<8x128xf32>, vector<8x128xf32>, vector<8x128xf32>, vector<8x128xf32> -> vector<64x128xf32>
    %c0_48 = arith.constant 0 : index
    %c0_49 = arith.constant 0 : index
    %98 = vector.load %arg7[%c0_48, %c0_49] : memref<128x128xf32, #tpu.memory_space<vmem>>, vector<128x128xf32>
    %cst_50 = arith.constant dense<0.000000e+00> : vector<64x128xf32>
    %99 = tpu.matmul %97, %98, %cst_50 {dimension_numbers = #tpu.dot_dimension_numbers<[1], [0], [0], [1], [0, 0, 1, 1], [], []>} : vector<64x128xf32>, vector<128x128xf32>, vector<64x128xf32> -> vector<64x128xf32>
    %c0_51 = arith.constant 0 : index
    %c0_52 = arith.constant 0 : index
    %100 = vector.load %arg8[%c0_51, %c0_52] : memref<1x128xf32, #tpu.memory_space<vmem>>, vector<1x128xf32>
    %101 = vector.broadcast %100 : vector<1x128xf32> to vector<64x128xf32>
    %102 = arith.addf %99, %101 : vector<64x128xf32>
    %103 = vector.shape_cast %102 : vector<64x128xf32> to vector<8x8x128xf32>
    %c0_53 = arith.constant 0 : index
    %c0_54 = arith.constant 0 : index
    %c0_55 = arith.constant 0 : index
    %104 = vector.load %arg9[%c0_53, %c0_54, %c0_55] : memref<8x8x128xf32, #tpu.memory_space<vmem>>, vector<8x8x128xf32>
    tpu.vector_store %arg9[%c0_53, %c0_54, %c0_55], %103 {strides = array<i32>} : memref<8x8x128xf32, #tpu.memory_space<vmem>>, vector<8x8x128xf32>,
    return
  }
  func.func @transform_0(%arg0: i32, %arg1: i32) -> (i32, i32, i32) {
    %c0_i32 = arith.constant 0 : i32
    %c0_i32_0 = arith.constant 0 : i32
    return %arg1, %arg0, %c0_i32 : i32, i32, i32
  }
  func.func @transform_1(%arg0: i32, %arg1: i32) -> (i32, i32) {
    %c0_i32 = arith.constant 0 : i32
    %c0_i32_0 = arith.constant 0 : i32
    %c0_i32_1 = arith.constant 0 : i32
    return %c0_i32, %c0_i32_0 : i32, i32
  }
  func.func @transform_2(%arg0: i32, %arg1: i32) -> (i32, i32, i32) {
    %c0_i32 = arith.constant 0 : i32
    %c0_i32_0 = arith.constant 0 : i32
    %c0_i32_1 = arith.constant 0 : i32
    %c0_i32_2 = arith.constant 0 : i32
    return %c0_i32, %c0_i32_0, %c0_i32_1 : i32, i32, i32
  }
  func.func @transform_3(%arg0: i32, %arg1: i32) -> (i32, i32, i32) {
    %c0_i32 = arith.constant 0 : i32
    %c0_i32_0 = arith.constant 0 : i32
    %c0_i32_1 = arith.constant 0 : i32
    %c0_i32_2 = arith.constant 0 : i32
    return %c0_i32, %c0_i32_0, %c0_i32_1 : i32, i32, i32
  }
  func.func @transform_4(%arg0: i32, %arg1: i32) -> (i32, i32, i32) {
    %c0_i32 = arith.constant 0 : i32
    %c0_i32_0 = arith.constant 0 : i32
    %c0_i32_1 = arith.constant 0 : i32
    %c0_i32_2 = arith.constant 0 : i32
    return %c0_i32, %c0_i32_0, %c0_i32_1 : i32, i32, i32
  }
  func.func @transform_5(%arg0: i32, %arg1: i32) -> (i32, i32) {
    %c0_i32 = arith.constant 0 : i32
    %c0_i32_0 = arith.constant 0 : i32
    %c0_i32_1 = arith.constant 0 : i32
    return %c0_i32, %c0_i32_0 : i32, i32
  }
  func.func @transform_6(%arg0: i32, %arg1: i32) -> (i32, i32) {
    %c0_i32 = arith.constant 0 : i32
    %c0_i32_0 = arith.constant 0 : i32
    %c0_i32_1 = arith.constant 0 : i32
    return %c0_i32, %c0_i32_0 : i32, i32
  }
  func.func @transform_7(%arg0: i32, %arg1: i32) -> (i32, i32, i32) {
    %c0_i32 = arith.constant 0 : i32
    %c0_i32_0 = arith.constant 0 : i32
    return %arg1, %arg0, %c0_i32 : i32, i32, i32
  }
}

</mosaic_0001>

<llo_original>
// kernel: rnn_forward.1
$region0: #{rnn_forward.1}
  #allocation0 [shape = 'u32[]', space=smem, size = 0x4, offset = 0x4, fixed_abs, tag = 'smem constant byte address 0x4 - core index']
  #allocation1 [shape = 'u32[144,128]{1,0:T(1,128)}', space=vmem, size = 0x12000, scoped, tag = 'internal scratch']
  #allocation2 [shape = 'f32[2,8,128]{2,1,0:T(8,128)}', space=vmem, size = 0x2000, scoped, tag = 'scratch operand']
  %s0 = inlined_call_operand.vmem [shape: f32[8,8,128], index: 0, kind: input, shape index: {}]
  %s1 = inlined_call_operand.vmem [shape: f32[128,128], index: 1, kind: input, shape index: {}]
  %s2 = inlined_call_operand.vmem [shape: f32[1,128,128], index: 2, kind: input, shape index: {}]
  %s3 = inlined_call_operand.vmem [shape: f32[2,128,128], index: 3, kind: input, shape index: {}]
  %s4 = inlined_call_operand.vmem [shape: f32[2,1,128], index: 4, kind: input, shape index: {}]
  %s5 = inlined_call_operand.vmem [shape: f32[128,128], index: 5, kind: input, shape index: {}]
  %s6 = inlined_call_operand.vmem [shape: f32[1,128], index: 6, kind: input, shape index: {}]
  %s7 = inlined_call_operand.vmem [shape: f32[8,8,128], index: 7, kind: output, shape index: {}]
  %s8 = sld [smem:[#allocation0]]
  $region42: #{rnn_forward.1} parent=0
    _
  %s10 = ssub.s32 1, %s8
  %s11 = scalar_select 0, %s10, %s8
  // Predicated region
  $region2: #{rnn_forward.1} parent=0 // pred_check
    _
  $region3: #{rnn_forward.1} parent=0 // pred_check_branch
    %13 = sbr.rel (0) target = $region5
  $region4: #{rnn_forward.1} parent=0 // pred_region
    _
  $region5: #{rnn_forward.1} parent=0 // pred_fallthru
    _
  // Predicated region
  $region6: #{rnn_forward.1} parent=0 // pred_check
    _
  $region7: #{rnn_forward.1} parent=0 // pred_check_branch
    %15 = sbr.rel (0) target = $region9
  $region8: #{rnn_forward.1} parent=0 // pred_region
    _
  $region9: #{rnn_forward.1} parent=0 // pred_fallthru
    _
  // Predicated region
  $region10: #{rnn_forward.1} parent=0 // pred_check
    _
  $region11: #{rnn_forward.1} parent=0 // pred_check_branch
    %17 = sbr.rel (0) target = $region13
  $region12: #{rnn_forward.1} parent=0 // pred_region
    _
  $region13: #{rnn_forward.1} parent=0 // pred_fallthru
    _
  // Predicated region
  $region14: #{rnn_forward.1} parent=0 // pred_check
    _
  $region15: #{rnn_forward.1} parent=0 // pred_check_branch
    %19 = sbr.rel (0) target = $region17
  $region16: #{rnn_forward.1} parent=0 // pred_region
    _
  $region17: #{rnn_forward.1} parent=0 // pred_fallthru
    _
  // Predicated region
  $region18: #{rnn_forward.1} parent=0 // pred_check
    _
  $region19: #{rnn_forward.1} parent=0 // pred_check_branch
    %21 = sbr.rel (0) target = $region21
  $region20: #{rnn_forward.1} parent=0 // pred_region
    _
  $region21: #{rnn_forward.1} parent=0 // pred_fallthru
    _
  // Predicated region
  $region22: #{rnn_forward.1} parent=0 // pred_check
    _
  $region23: #{rnn_forward.1} parent=0 // pred_check_branch
    %23 = sbr.rel (0) target = $region25
  $region24: #{rnn_forward.1} parent=0 // pred_region
    _
  $region25: #{rnn_forward.1} parent=0 // pred_fallthru
    _
  // Predicated region
  $region26: #{rnn_forward.1} parent=0 // pred_check
    _
  $region27: #{rnn_forward.1} parent=0 // pred_check_branch
    %25 = sbr.rel (0) target = $region29
  $region28: #{rnn_forward.1} parent=0 // pred_region
    _
  $region29: #{rnn_forward.1} parent=0 // pred_fallthru
    _
  %p26 = scmp.eq.s32.totalorder 0, 0
  // Predicated region
  $region30: #{rnn_forward.1} parent=0 // pred_check
    %p27 = pneg %p26
  $region31: #{rnn_forward.1} parent=0 // pred_check_branch
    %29 = sbr.rel (%p27) target = $region33
  $region32: #{rnn_forward.1} parent=0 // pred_region
    %30 = vst [vmem:[#allocation2] sm:$0xff] 0.0
    %31 = vst [vmem:[#allocation2 + $0x8] sm:$0xff] 0.0
  $region33: #{rnn_forward.1} parent=0 // pred_fallthru
    _
  %v32 = vld [vmem:[%s0] sm:$0xff]
  %v33 = vld [vmem:[%s0 + $0x8] sm:$0xff]
  %v34 = vld [vmem:[%s0 + $0x10] sm:$0xff]
  %v35 = vld [vmem:[%s0 + $0x18] sm:$0xff]
  %v36 = vld [vmem:[%s0 + $0x20] sm:$0xff]
  %v37 = vld [vmem:[%s0 + $0x28] sm:$0xff]
  %v38 = vld [vmem:[%s0 + $0x30] sm:$0xff]
  %v39 = vld [vmem:[%s0 + $0x38] sm:$0xff]
  %v40 = vld [vmem:[%s1] sm:$0xff]
  %v41 = vld [vmem:[%s1 + $0x8] sm:$0xff]
  %v42 = vld [vmem:[%s1 + $0x10] sm:$0xff]
  %v43 = vld [vmem:[%s1 + $0x18] sm:$0xff]
  %v44 = vld [vmem:[%s1 + $0x20] sm:$0xff]
  %v45 = vld [vmem:[%s1 + $0x28] sm:$0xff]
  %v46 = vld [vmem:[%s1 + $0x30] sm:$0xff]
  %v47 = vld [vmem:[%s1 + $0x38] sm:$0xff]
  %v48 = vld [vmem:[%s1 + $0x40] sm:$0xff]
  %v49 = vld [vmem:[%s1 + $0x48] sm:$0xff]
  %v50 = vld [vmem:[%s1 + $0x50] sm:$0xff]
  %v51 = vld [vmem:[%s1 + $0x58] sm:$0xff]
  %v52 = vld [vmem:[%s1 + $0x60] sm:$0xff]
  %v53 = vld [vmem:[%s1 + $0x68] sm:$0xff]
  %v54 = vld [vmem:[%s1 + $0x70] sm:$0xff]
  %v55 = vld [vmem:[%s1 + $0x78] sm:$0xff]
  %v56 = vld [vmem:[%s4] sm:$0x1]
  %v58 = vlaneseq
  %v59 = vshrl.u32 %v58, 7
  %v60 = vsub.s32 0, %v59
  %v61 = vrot.slane %v56, %v60
  %63 = vmatprep.subr.mxu0 0.0
  %64 = vmatpush1.msra.mxu0 %v40
  %65 = vmatprep.subr.mxu0 0.0
  %66 = vmatpush1.msra.mxu0 %v41
  %67 = vmatprep.subr.mxu0 0.0
  %68 = vmatpush1.msra.mxu0 %v42
  %69 = vmatprep.subr.mxu0 0.0
  %70 = vmatpush1.msra.mxu0 %v43
  %71 = vmatprep.subr.mxu0 0.0
  %72 = vmatpush1.msra.mxu0 %v44
  %73 = vmatprep.subr.mxu0 0.0
  %74 = vmatpush1.msra.mxu0 %v45
  %75 = vmatprep.subr.mxu0 0.0
  %76 = vmatpush1.msra.mxu0 %v46
  %77 = vmatprep.subr.mxu0 0.0
  %78 = vmatpush1.msra.mxu0 %v47
  %79 = vmatprep.subr.mxu0 0.0
  %80 = vmatpush1.msra.mxu0 %v48
  %81 = vmatprep.subr.mxu0 0.0
  %82 = vmatpush1.msra.mxu0 %v49
  %83 = vmatprep.subr.mxu0 0.0
  %84 = vmatpush1.msra.mxu0 %v50
  %85 = vmatprep.subr.mxu0 0.0
  %86 = vmatpush1.msra.mxu0 %v51
  %87 = vmatprep.subr.mxu0 0.0
  %88 = vmatpush1.msra.mxu0 %v52
  %89 = vmatprep.subr.mxu0 0.0
  %90 = vmatpush1.msra.mxu0 %v53
  %91 = vmatprep.subr.mxu0 0.0
  %92 = vmatpush1.msra.mxu0 %v54
  %93 = vmatprep.subr.mxu0 0.0
  %94 = vmatpush1.msra.mxu0 %v55
  %95 = vmatprep.subr.mxu0 0.0
  %96 = vmatpush1.msra.mxu0 0.0
  %97 = vmatprep.subr.mxu0 0.0
  %98 = vmatpush1.msra.mxu0 0.0
  %99 = vmatprep.subr.mxu0 0.0
  %100 = vmatpush1.msra.mxu0 0.0
  %101 = vmatprep.subr.mxu0 0.0
  %102 = vmatpush1.msra.mxu0 0.0
  %103 = vmatprep.subr.mxu0 0.0
  %104 = vmatpush1.msra.mxu0 0.0
  %105 = vmatprep.subr.mxu0 0.0
  %106 = vmatpush1.msra.mxu0 0.0
  %107 = vmatprep.subr.mxu0 0.0
  %108 = vmatpush1.msra.mxu0 0.0
  %109 = vmatprep.subr.mxu0 0.0
  %110 = vmatpush1.msra.mxu0 0.0
  %111 = vmatprep.subr.mxu0 0.0
  %112 = vmatpush1.msra.mxu0 0.0
  %113 = vmatprep.subr.mxu0 0.0
  %114 = vmatpush1.msra.mxu0 0.0
  %115 = vmatprep.subr.mxu0 0.0
  %116 = vmatpush1.msra.mxu0 0.0
  %117 = vmatprep.subr.mxu0 0.0
  %118 = vmatpush1.msra.mxu0 0.0
  %119 = vmatprep.subr.mxu0 0.0
  %120 = vmatpush1.msra.mxu0 0.0
  %121 = vmatprep.subr.mxu0 0.0
  %122 = vmatpush1.msra.mxu0 0.0
  %123 = vmatprep.subr.mxu0 0.0
  %124 = vmatpush1.msra.mxu0 0.0
  %125 = vmatprep.subr.mxu0 0.0
  %126 = vmatpush1.msra.mxu0 0.0
  %127 = vmatprep.mubr.f32.mxu0 0.0
  %128 = vmatmul.mubr.f32.gmra.mrb[0].mxu0 %v32
  %v129 = vpop.f32.mrb[0].mxu0
  %v130 = vadd.f32 %v61, %v129
  %v131 = vpop.f32.mrb[0].mxu0
  %132 = vmatprep.mubr.f32.mxu0 0.0
  %133 = vmatmul.mubr.f32.gmra.mrb[0].mxu0 %v33
  %v134 = vpop.f32.mrb[0].mxu0
  %v135 = vadd.f32 %v61, %v134
  %v136 = vpop.f32.mrb[0].mxu0
  %137 = vmatprep.mubr.f32.mxu0 0.0
  %138 = vmatmul.mubr.f32.gmra.mrb[0].mxu0 %v34
  %v139 = vpop.f32.mrb[0].mxu0
  %v140 = vadd.f32 %v61, %v139
  %v141 = vpop.f32.mrb[0].mxu0
  %142 = vmatprep.mubr.f32.mxu0 0.0
  %143 = vmatmul.mubr.f32.gmra.mrb[0].mxu0 %v35
  %v144 = vpop.f32.mrb[0].mxu0
  %v145 = vadd.f32 %v61, %v144
  %v146 = vpop.f32.mrb[0].mxu0
  %147 = vmatprep.mubr.f32.mxu0 0.0
  %148 = vmatmul.mubr.f32.gmra.mrb[0].mxu0 %v36
  %v149 = vpop.f32.mrb[0].mxu0
  %v150 = vadd.f32 %v61, %v149
  %v151 = vpop.f32.mrb[0].mxu0
  %152 = vmatprep.mubr.f32.mxu0 0.0
  %153 = vmatmul.mubr.f32.gmra.mrb[0].mxu0 %v37
  %v154 = vpop.f32.mrb[0].mxu0
  %v155 = vadd.f32 %v61, %v154
  %v156 = vpop.f32.mrb[0].mxu0
  %157 = vmatprep.mubr.f32.mxu0 0.0
  %158 = vmatmul.mubr.f32.gmra.mrb[0].mxu0 %v38
  %v159 = vpop.f32.mrb[0].mxu0
  %v160 = vadd.f32 %v61, %v159
  %v161 = vpop.f32.mrb[0].mxu0
  %162 = vmatprep.mubr.f32.mxu0 0.0
  %163 = vmatmul.mubr.f32.gmra.mrb[0].mxu0 %v39
  %v164 = vpop.f32.mrb[0].mxu0
  %v165 = vadd.f32 %v61, %v164
  %v166 = vpop.f32.mrb[0].mxu0
  %167 = vdwg.mxu0
  %v168 = vld [vmem:[%s3] sm:$0xff]
  %v169 = vld [vmem:[%s3 + $0x8] sm:$0xff]
  %v170 = vld [vmem:[%s3 + $0x10] sm:$0xff]
  %v171 = vld [vmem:[%s3 + $0x18] sm:$0xff]
  %v172 = vld [vmem:[%s3 + $0x20] sm:$0xff]
  %v173 = vld [vmem:[%s3 + $0x28] sm:$0xff]
  %v174 = vld [vmem:[%s3 + $0x30] sm:$0xff]
  %v175 = vld [vmem:[%s3 + $0x38] sm:$0xff]
  %v176 = vld [vmem:[%s3 + $0x40] sm:$0xff]
  %v177 = vld [vmem:[%s3 + $0x48] sm:$0xff]
  %v178 = vld [vmem:[%s3 + $0x50] sm:$0xff]
  %v179 = vld [vmem:[%s3 + $0x58] sm:$0xff]
  %v180 = vld [vmem:[%s3 + $0x60] sm:$0xff]
  %v181 = vld [vmem:[%s3 + $0x68] sm:$0xff]
  %v182 = vld [vmem:[%s3 + $0x70] sm:$0xff]
  %v183 = vld [vmem:[%s3 + $0x78] sm:$0xff]
  %v184 = vld [vmem:[#allocation2] sm:$0xff]
  %185 = vmatprep.subr.mxu0 0.0
  %186 = vmatpush1.msra.mxu0 %v168
  %187 = vmatprep.subr.mxu0 0.0
  %188 = vmatpush1.msra.mxu0 %v169
  %189 = vmatprep.subr.mxu0 0.0
  %190 = vmatpush1.msra.mxu0 %v170
  %191 = vmatprep.subr.mxu0 0.0
  %192 = vmatpush1.msra.mxu0 %v171
  %193 = vmatprep.subr.mxu0 0.0
  %194 = vmatpush1.msra.mxu0 %v172
  %195 = vmatprep.subr.mxu0 0.0
  %196 = vmatpush1.msra.mxu0 %v173
  %197 = vmatprep.subr.mxu0 0.0
  %198 = vmatpush1.msra.mxu0 %v174
  %199 = vmatprep.subr.mxu0 0.0
  %200 = vmatpush1.msra.mxu0 %v175
  %201 = vmatprep.subr.mxu0 0.0
  %202 = vmatpush1.msra.mxu0 %v176
  %203 = vmatprep.subr.mxu0 0.0
  %204 = vmatpush1.msra.mxu0 %v177
  %205 = vmatprep.subr.mxu0 0.0
  %206 = vmatpush1.msra.mxu0 %v178
  %207 = vmatprep.subr.mxu0 0.0
  %208 = vmatpush1.msra.mxu0 %v179
  %209 = vmatprep.subr.mxu0 0.0
  %210 = vmatpush1.msra.mxu0 %v180
  %211 = vmatprep.subr.mxu0 0.0
  %212 = vmatpush1.msra.mxu0 %v181
  %213 = vmatprep.subr.mxu0 0.0
  %214 = vmatpush1.msra.mxu0 %v182
  %215 = vmatprep.subr.mxu0 0.0
  %216 = vmatpush1.msra.mxu0 %v183
  %217 = vmatprep.subr.mxu0 0.0
  %218 = vmatpush1.msra.mxu0 0.0
  %219 = vmatprep.subr.mxu0 0.0
  %220 = vmatpush1.msra.mxu0 0.0
  %221 = vmatprep.subr.mxu0 0.0
  %222 = vmatpush1.msra.mxu0 0.0
  %223 = vmatprep.subr.mxu0 0.0
  %224 = vmatpush1.msra.mxu0 0.0
  %225 = vmatprep.subr.mxu0 0.0
  %226 = vmatpush1.msra.mxu0 0.0
  %227 = vmatprep.subr.mxu0 0.0
  %228 = vmatpush1.msra.mxu0 0.0
  %229 = vmatprep.subr.mxu0 0.0
  %230 = vmatpush1.msra.mxu0 0.0
  %231 = vmatprep.subr.mxu0 0.0
  %232 = vmatpush1.msra.mxu0 0.0
  %233 = vmatprep.subr.mxu0 0.0
  %234 = vmatpush1.msra.mxu0 0.0
  %235 = vmatprep.subr.mxu0 0.0
  %236 = vmatpush1.msra.mxu0 0.0
  %237 = vmatprep.subr.mxu0 0.0
  %238 = vmatpush1.msra.mxu0 0.0
  %239 = vmatprep.subr.mxu0 0.0
  %240 = vmatpush1.msra.mxu0 0.0
  %241 = vmatprep.subr.mxu0 0.0
  %242 = vmatpush1.msra.mxu0 0.0
  %243 = vmatprep.subr.mxu0 0.0
  %244 = vmatpush1.msra.mxu0 0.0
  %245 = vmatprep.subr.mxu0 0.0
  %246 = vmatpush1.msra.mxu0 0.0
  %247 = vmatprep.subr.mxu0 0.0
  %248 = vmatpush1.msra.mxu0 0.0
  %249 = vmatprep.mubr.f32.mxu0 0.0
  %250 = vmatmul.mubr.f32.gmra.mrb[0].mxu0 %v184
  %v251 = vpop.f32.mrb[0].mxu0
  %v252 = vadd.f32 0.0, %v251
  %v253 = vpop.f32.mrb[0].mxu0
  %254 = vdwg.mxu0
  %v255 = vadd.f32 %v130, %v252
  %v256 = vtanh.pop %v255
  %257 = vmatprep.subr.mxu0 0.0
  %258 = vmatpush1.msra.mxu0 %v168
  %259 = vmatprep.subr.mxu0 0.0
  %260 = vmatpush1.msra.mxu0 %v169
  %261 = vmatprep.subr.mxu0 0.0
  %262 = vmatpush1.msra.mxu0 %v170
  %263 = vmatprep.subr.mxu0 0.0
  %264 = vmatpush1.msra.mxu0 %v171
  %265 = vmatprep.subr.mxu0 0.0
  %266 = vmatpush1.msra.mxu0 %v172
  %267 = vmatprep.subr.mxu0 0.0
  %268 = vmatpush1.msra.mxu0 %v173
  %269 = vmatprep.subr.mxu0 0.0
  %270 = vmatpush1.msra.mxu0 %v174
  %271 = vmatprep.subr.mxu0 0.0
  %272 = vmatpush1.msra.mxu0 %v175
  %273 = vmatprep.subr.mxu0 0.0
  %274 = vmatpush1.msra.mxu0 %v176
  %275 = vmatprep.subr.mxu0 0.0
  %276 = vmatpush1.msra.mxu0 %v177
  %277 = vmatprep.subr.mxu0 0.0
  %278 = vmatpush1.msra.mxu0 %v178
  %279 = vmatprep.subr.mxu0 0.0
  %280 = vmatpush1.msra.mxu0 %v179
  %281 = vmatprep.subr.mxu0 0.0
  %282 = vmatpush1.msra.mxu0 %v180
  %283 = vmatprep.subr.mxu0 0.0
  %284 = vmatpush1.msra.mxu0 %v181
  %285 = vmatprep.subr.mxu0 0.0
  %286 = vmatpush1.msra.mxu0 %v182
  %287 = vmatprep.subr.mxu0 0.0
  %288 = vmatpush1.msra.mxu0 %v183
  %289 = vmatprep.subr.mxu0 0.0
  %290 = vmatpush1.msra.mxu0 0.0
  %291 = vmatprep.subr.mxu0 0.0
  %292 = vmatpush1.msra.mxu0 0.0
  %293 = vmatprep.subr.mxu0 0.0
  %294 = vmatpush1.msra.mxu0 0.0
  %295 = vmatprep.subr.mxu0 0.0
  %296 = vmatpush1.msra.mxu0 0.0
  %297 = vmatprep.subr.mxu0 0.0
  %298 = vmatpush1.msra.mxu0 0.0
  %299 = vmatprep.subr.mxu0 0.0
  %300 = vmatpush1.msra.mxu0 0.0
  %301 = vmatprep.subr.mxu0 0.0
  %302 = vmatpush1.msra.mxu0 0.0
  %303 = vmatprep.subr.mxu0 0.0
  %304 = vmatpush1.msra.mxu0 0.0
  %305 = vmatprep.subr.mxu0 0.0
  %306 = vmatpush1.msra.mxu0 0.0
  %307 = vmatprep.subr.mxu0 0.0
  %308 = vmatpush1.msra.mxu0 0.0
  %309 = vmatprep.subr.mxu0 0.0
  %310 = vmatpush1.msra.mxu0 0.0
  %311 = vmatprep.subr.mxu0 0.0
  %312 = vmatpush1.msra.mxu0 0.0
  %313 = vmatprep.subr.mxu0 0.0
  %314 = vmatpush1.msra.mxu0 0.0
  %315 = vmatprep.subr.mxu0 0.0
  %316 = vmatpush1.msra.mxu0 0.0
  %317 = vmatprep.subr.mxu0 0.0
  %318 = vmatpush1.msra.mxu0 0.0
  %319 = vmatprep.subr.mxu0 0.0
  %320 = vmatpush1.msra.mxu0 0.0
  %321 = vmatprep.mubr.f32.mxu0 0.0
  %322 = vmatmul.mubr.f32.gmra.mrb[0].mxu0 %v256
  %v323 = vpop.f32.mrb[0].mxu0
  %v324 = vadd.f32 0.0, %v323
  %v325 = vpop.f32.mrb[0].mxu0
  %326 = vdwg.mxu0
  %v327 = vadd.f32 %v135, %v324
  %v328 = vtanh.pop %v327
  %329 = vmatprep.subr.mxu0 0.0
  %330 = vmatpush1.msra.mxu0 %v168
  %331 = vmatprep.subr.mxu0 0.0
  %332 = vmatpush1.msra.mxu0 %v169
  %333 = vmatprep.subr.mxu0 0.0
  %334 = vmatpush1.msra.mxu0 %v170
  %335 = vmatprep.subr.mxu0 0.0
  %336 = vmatpush1.msra.mxu0 %v171
  %337 = vmatprep.subr.mxu0 0.0
  %338 = vmatpush1.msra.mxu0 %v172
  %339 = vmatprep.subr.mxu0 0.0
  %340 = vmatpush1.msra.mxu0 %v173
  %341 = vmatprep.subr.mxu0 0.0
  %342 = vmatpush1.msra.mxu0 %v174
  %343 = vmatprep.subr.mxu0 0.0
  %344 = vmatpush1.msra.mxu0 %v175
  %345 = vmatprep.subr.mxu0 0.0
  %346 = vmatpush1.msra.mxu0 %v176
  %347 = vmatprep.subr.mxu0 0.0
  %348 = vmatpush1.msra.mxu0 %v177
  %349 = vmatprep.subr.mxu0 0.0
  %350 = vmatpush1.msra.mxu0 %v178
  %351 = vmatprep.subr.mxu0 0.0
  %352 = vmatpush1.msra.mxu0 %v179
  %353 = vmatprep.subr.mxu0 0.0
  %354 = vmatpush1.msra.mxu0 %v180
  %355 = vmatprep.subr.mxu0 0.0
  %356 = vmatpush1.msra.mxu0 %v181
  %357 = vmatprep.subr.mxu0 0.0
  %358 = vmatpush1.msra.mxu0 %v182
  %359 = vmatprep.subr.mxu0 0.0
  %360 = vmatpush1.msra.mxu0 %v183
  %361 = vmatprep.subr.mxu0 0.0
  %362 = vmatpush1.msra.mxu0 0.0
  %363 = vmatprep.subr.mxu0 0.0
  %364 = vmatpush1.msra.mxu0 0.0
  %365 = vmatprep.subr.mxu0 0.0
  %366 = vmatpush1.msra.mxu0 0.0
  %367 = vmatprep.subr.mxu0 0.0
  %368 = vmatpush1.msra.mxu0 0.0
  %369 = vmatprep.subr.mxu0 0.0
  %370 = vmatpush1.msra.mxu0 0.0
  %371 = vmatprep.subr.mxu0 0.0
  %372 = vmatpush1.msra.mxu0 0.0
  %373 = vmatprep.subr.mxu0 0.0
  %374 = vmatpush1.msra.mxu0 0.0
  %375 = vmatprep.subr.mxu0 0.0
  %376 = vmatpush1.msra.mxu0 0.0
  %377 = vmatprep.subr.mxu0 0.0
  %378 = vmatpush1.msra.mxu0 0.0
  %379 = vmatprep.subr.mxu0 0.0
  %380 = vmatpush1.msra.mxu0 0.0
  %381 = vmatprep.subr.mxu0 0.0
  %382 = vmatpush1.msra.mxu0 0.0
  %383 = vmatprep.subr.mxu0 0.0
  %384 = vmatpush1.msra.mxu0 0.0
  %385 = vmatprep.subr.mxu0 0.0
  %386 = vmatpush1.msra.mxu0 0.0
  %387 = vmatprep.subr.mxu0 0.0
  %388 = vmatpush1.msra.mxu0 0.0
  %389 = vmatprep.subr.mxu0 0.0
  %390 = vmatpush1.msra.mxu0 0.0
  %391 = vmatprep.subr.mxu0 0.0
  %392 = vmatpush1.msra.mxu0 0.0
  %393 = vmatprep.mubr.f32.mxu0 0.0
  %394 = vmatmul.mubr.f32.gmra.mrb[0].mxu0 %v328
  %v395 = vpop.f32.mrb[0].mxu0
  %v396 = vadd.f32 0.0, %v395
  %v397 = vpop.f32.mrb[0].mxu0
  %398 = vdwg.mxu0
  %v399 = vadd.f32 %v140, %v396
  %v400 = vtanh.pop %v399
  %401 = vmatprep.subr.mxu0 0.0
  %402 = vmatpush1.msra.mxu0 %v168
  %403 = vmatprep.subr.mxu0 0.0
  %404 = vmatpush1.msra.mxu0 %v169
  %405 = vmatprep.subr.mxu0 0.0
  %406 = vmatpush1.msra.mxu0 %v170
  %407 = vmatprep.subr.mxu0 0.0
  %408 = vmatpush1.msra.mxu0 %v171
  %409 = vmatprep.subr.mxu0 0.0
  %410 = vmatpush1.msra.mxu0 %v172
  %411 = vmatprep.subr.mxu0 0.0
  %412 = vmatpush1.msra.mxu0 %v173
  %413 = vmatprep.subr.mxu0 0.0
  %414 = vmatpush1.msra.mxu0 %v174
  %415 = vmatprep.subr.mxu0 0.0
  %416 = vmatpush1.msra.mxu0 %v175
  %417 = vmatprep.subr.mxu0 0.0
  %418 = vmatpush1.msra.mxu0 %v176
  %419 = vmatprep.subr.mxu0 0.0
  %420 = vmatpush1.msra.mxu0 %v177
  %421 = vmatprep.subr.mxu0 0.0
  %422 = vmatpush1.msra.mxu0 %v178
  %423 = vmatprep.subr.mxu0 0.0
  %424 = vmatpush1.msra.mxu0 %v179
  %425 = vmatprep.subr.mxu0 0.0
  %426 = vmatpush1.msra.mxu0 %v180
  %427 = vmatprep.subr.mxu0 0.0
  %428 = vmatpush1.msra.mxu0 %v181
  %429 = vmatprep.subr.mxu0 0.0
  %430 = vmatpush1.msra.mxu0 %v182
  %431 = vmatprep.subr.mxu0 0.0
  %432 = vmatpush1.msra.mxu0 %v183
  %433 = vmatprep.subr.mxu0 0.0
  %434 = vmatpush1.msra.mxu0 0.0
  %435 = vmatprep.subr.mxu0 0.0
  %436 = vmatpush1.msra.mxu0 0.0
  %437 = vmatprep.subr.mxu0 0.0
  %438 = vmatpush1.msra.mxu0 0.0
  %439 = vmatprep.subr.mxu0 0.0
  %440 = vmatpush1.msra.mxu0 0.0
  %441 = vmatprep.subr.mxu0 0.0
  %442 = vmatpush1.msra.mxu0 0.0
  %443 = vmatprep.subr.mxu0 0.0
  %444 = vmatpush1.msra.mxu0 0.0
  %445 = vmatprep.subr.mxu0 0.0
  %446 = vmatpush1.msra.mxu0 0.0
  %447 = vmatprep.subr.mxu0 0.0
  %448 = vmatpush1.msra.mxu0 0.0
  %449 = vmatprep.subr.mxu0 0.0
  %450 = vmatpush1.msra.mxu0 0.0
  %451 = vmatprep.subr.mxu0 0.0
  %452 = vmatpush1.msra.mxu0 0.0
  %453 = vmatprep.subr.mxu0 0.0
  %454 = vmatpush1.msra.mxu0 0.0
  %455 = vmatprep.subr.mxu0 0.0
  %456 = vmatpush1.msra.mxu0 0.0
  %457 = vmatprep.subr.mxu0 0.0
  %458 = vmatpush1.msra.mxu0 0.0
  %459 = vmatprep.subr.mxu0 0.0
  %460 = vmatpush1.msra.mxu0 0.0
  %461 = vmatprep.subr.mxu0 0.0
  %462 = vmatpush1.msra.mxu0 0.0
  %463 = vmatprep.subr.mxu0 0.0
  %464 = vmatpush1.msra.mxu0 0.0
  %465 = vmatprep.mubr.f32.mxu0 0.0
  %466 = vmatmul.mubr.f32.gmra.mrb[0].mxu0 %v400
  %v467 = vpop.f32.mrb[0].mxu0
  %v468 = vadd.f32 0.0, %v467
  %v469 = vpop.f32.mrb[0].mxu0
  %470 = vdwg.mxu0
  %v471 = vadd.f32 %v145, %v468
  %v472 = vtanh.pop %v471
  %473 = vmatprep.subr.mxu0 0.0
  %474 = vmatpush1.msra.mxu0 %v168
  %475 = vmatprep.subr.mxu0 0.0
  %476 = vmatpush1.msra.mxu0 %v169
  %477 = vmatprep.subr.mxu0 0.0
  %478 = vmatpush1.msra.mxu0 %v170
  %479 = vmatprep.subr.mxu0 0.0
  %480 = vmatpush1.msra.mxu0 %v171
  %481 = vmatprep.subr.mxu0 0.0
  %482 = vmatpush1.msra.mxu0 %v172
  %483 = vmatprep.subr.mxu0 0.0
  %484 = vmatpush1.msra.mxu0 %v173
  %485 = vmatprep.subr.mxu0 0.0
  %486 = vmatpush1.msra.mxu0 %v174
  %487 = vmatprep.subr.mxu0 0.0
  %488 = vmatpush1.msra.mxu0 %v175
  %489 = vmatprep.subr.mxu0 0.0
  %490 = vmatpush1.msra.mxu0 %v176
  %491 = vmatprep.subr.mxu0 0.0
  %492 = vmatpush1.msra.mxu0 %v177
  %493 = vmatprep.subr.mxu0 0.0
  %494 = vmatpush1.msra.mxu0 %v178
  %495 = vmatprep.subr.mxu0 0.0
  %496 = vmatpush1.msra.mxu0 %v179
  %497 = vmatprep.subr.mxu0 0.0
  %498 = vmatpush1.msra.mxu0 %v180
  %499 = vmatprep.subr.mxu0 0.0
  %500 = vmatpush1.msra.mxu0 %v181
  %501 = vmatprep.subr.mxu0 0.0
  %502 = vmatpush1.msra.mxu0 %v182
  %503 = vmatprep.subr.mxu0 0.0
  %504 = vmatpush1.msra.mxu0 %v183
  %505 = vmatprep.subr.mxu0 0.0
  %506 = vmatpush1.msra.mxu0 0.0
  %507 = vmatprep.subr.mxu0 0.0
  %508 = vmatpush1.msra.mxu0 0.0
  %509 = vmatprep.subr.mxu0 0.0
  %510 = vmatpush1.msra.mxu0 0.0
  %511 = vmatprep.subr.mxu0 0.0
  %512 = vmatpush1.msra.mxu0 0.0
  %513 = vmatprep.subr.mxu0 0.0
  %514 = vmatpush1.msra.mxu0 0.0
  %515 = vmatprep.subr.mxu0 0.0
  %516 = vmatpush1.msra.mxu0 0.0
  %517 = vmatprep.subr.mxu0 0.0
  %518 = vmatpush1.msra.mxu0 0.0
  %519 = vmatprep.subr.mxu0 0.0
  %520 = vmatpush1.msra.mxu0 0.0
  %521 = vmatprep.subr.mxu0 0.0
  %522 = vmatpush1.msra.mxu0 0.0
  %523 = vmatprep.subr.mxu0 0.0
  %524 = vmatpush1.msra.mxu0 0.0
  %525 = vmatprep.subr.mxu0 0.0
  %526 = vmatpush1.msra.mxu0 0.0
  %527 = vmatprep.subr.mxu0 0.0
  %528 = vmatpush1.msra.mxu0 0.0
  %529 = vmatprep.subr.mxu0 0.0
  %530 = vmatpush1.msra.mxu0 0.0
  %531 = vmatprep.subr.mxu0 0.0
  %532 = vmatpush1.msra.mxu0 0.0
  %533 = vmatprep.subr.mxu0 0.0
  %534 = vmatpush1.msra.mxu0 0.0
  %535 = vmatprep.subr.mxu0 0.0
  %536 = vmatpush1.msra.mxu0 0.0
  %537 = vmatprep.mubr.f32.mxu0 0.0
  %538 = vmatmul.mubr.f32.gmra.mrb[0].mxu0 %v472
  %v539 = vpop.f32.mrb[0].mxu0
  %v540 = vadd.f32 0.0, %v539
  %v541 = vpop.f32.mrb[0].mxu0
  %542 = vdwg.mxu0
  %v543 = vadd.f32 %v150, %v540
  %v544 = vtanh.pop %v543
  %545 = vmatprep.subr.mxu0 0.0
  %546 = vmatpush1.msra.mxu0 %v168
  %547 = vmatprep.subr.mxu0 0.0
  %548 = vmatpush1.msra.mxu0 %v169
  %549 = vmatprep.subr.mxu0 0.0
  %550 = vmatpush1.msra.mxu0 %v170
  %551 = vmatprep.subr.mxu0 0.0
  %552 = vmatpush1.msra.mxu0 %v171
  %553 = vmatprep.subr.mxu0 0.0
  %554 = vmatpush1.msra.mxu0 %v172
  %555 = vmatprep.subr.mxu0 0.0
  %556 = vmatpush1.msra.mxu0 %v173
  %557 = vmatprep.subr.mxu0 0.0
  %558 = vmatpush1.msra.mxu0 %v174
  %559 = vmatprep.subr.mxu0 0.0
  %560 = vmatpush1.msra.mxu0 %v175
  %561 = vmatprep.subr.mxu0 0.0
  %562 = vmatpush1.msra.mxu0 %v176
  %563 = vmatprep.subr.mxu0 0.0
  %564 = vmatpush1.msra.mxu0 %v177
  %565 = vmatprep.subr.mxu0 0.0
  %566 = vmatpush1.msra.mxu0 %v178
  %567 = vmatprep.subr.mxu0 0.0
  %568 = vmatpush1.msra.mxu0 %v179
  %569 = vmatprep.subr.mxu0 0.0
  %570 = vmatpush1.msra.mxu0 %v180
  %571 = vmatprep.subr.mxu0 0.0
  %572 = vmatpush1.msra.mxu0 %v181
  %573 = vmatprep.subr.mxu0 0.0
  %574 = vmatpush1.msra.mxu0 %v182
  %575 = vmatprep.subr.mxu0 0.0
  %576 = vmatpush1.msra.mxu0 %v183
  %577 = vmatprep.subr.mxu0 0.0
  %578 = vmatpush1.msra.mxu0 0.0
  %579 = vmatprep.subr.mxu0 0.0
  %580 = vmatpush1.msra.mxu0 0.0
  %581 = vmatprep.subr.mxu0 0.0
  %582 = vmatpush1.msra.mxu0 0.0
  %583 = vmatprep.subr.mxu0 0.0
  %584 = vmatpush1.msra.mxu0 0.0
  %585 = vmatprep.subr.mxu0 0.0
  %586 = vmatpush1.msra.mxu0 0.0
  %587 = vmatprep.subr.mxu0 0.0
  %588 = vmatpush1.msra.mxu0 0.0
  %589 = vmatprep.subr.mxu0 0.0
  %590 = vmatpush1.msra.mxu0 0.0
  %591 = vmatprep.subr.mxu0 0.0
  %592 = vmatpush1.msra.mxu0 0.0
  %593 = vmatprep.subr.mxu0 0.0
  %594 = vmatpush1.msra.mxu0 0.0
  %595 = vmatprep.subr.mxu0 0.0
  %596 = vmatpush1.msra.mxu0 0.0
  %597 = vmatprep.subr.mxu0 0.0
  %598 = vmatpush1.msra.mxu0 0.0
  %599 = vmatprep.subr.mxu0 0.0
  %600 = vmatpush1.msra.mxu0 0.0
  %601 = vmatprep.subr.mxu0 0.0
  %602 = vmatpush1.msra.mxu0 0.0
  %603 = vmatprep.subr.mxu0 0.0
  %604 = vmatpush1.msra.mxu0 0.0
  %605 = vmatprep.subr.mxu0 0.0
  %606 = vmatpush1.msra.mxu0 0.0
  %607 = vmatprep.subr.mxu0 0.0
  %608 = vmatpush1.msra.mxu0 0.0
  %609 = vmatprep.mubr.f32.mxu0 0.0
  %610 = vmatmul.mubr.f32.gmra.mrb[0].mxu0 %v544
  %v611 = vpop.f32.mrb[0].mxu0
  %v612 = vadd.f32 0.0, %v611
  %v613 = vpop.f32.mrb[0].mxu0
  %614 = vdwg.mxu0
  %v615 = vadd.f32 %v155, %v612
  %v616 = vtanh.pop %v615
  %617 = vmatprep.subr.mxu0 0.0
  %618 = vmatpush1.msra.mxu0 %v168
  %619 = vmatprep.subr.mxu0 0.0
  %620 = vmatpush1.msra.mxu0 %v169
  %621 = vmatprep.subr.mxu0 0.0
  %622 = vmatpush1.msra.mxu0 %v170
  %623 = vmatprep.subr.mxu0 0.0
  %624 = vmatpush1.msra.mxu0 %v171
  %625 = vmatprep.subr.mxu0 0.0
  %626 = vmatpush1.msra.mxu0 %v172
  %627 = vmatprep.subr.mxu0 0.0
  %628 = vmatpush1.msra.mxu0 %v173
  %629 = vmatprep.subr.mxu0 0.0
  %630 = vmatpush1.msra.mxu0 %v174
  %631 = vmatprep.subr.mxu0 0.0
  %632 = vmatpush1.msra.mxu0 %v175
  %633 = vmatprep.subr.mxu0 0.0
  %634 = vmatpush1.msra.mxu0 %v176
  %635 = vmatprep.subr.mxu0 0.0
  %636 = vmatpush1.msra.mxu0 %v177
  %637 = vmatprep.subr.mxu0 0.0
  %638 = vmatpush1.msra.mxu0 %v178
  %639 = vmatprep.subr.mxu0 0.0
  %640 = vmatpush1.msra.mxu0 %v179
  %641 = vmatprep.subr.mxu0 0.0
  %642 = vmatpush1.msra.mxu0 %v180
  %643 = vmatprep.subr.mxu0 0.0
  %644 = vmatpush1.msra.mxu0 %v181
  %645 = vmatprep.subr.mxu0 0.0
  %646 = vmatpush1.msra.mxu0 %v182
  %647 = vmatprep.subr.mxu0 0.0
  %648 = vmatpush1.msra.mxu0 %v183
  %649 = vmatprep.subr.mxu0 0.0
  %650 = vmatpush1.msra.mxu0 0.0
  %651 = vmatprep.subr.mxu0 0.0
  %652 = vmatpush1.msra.mxu0 0.0
  %653 = vmatprep.subr.mxu0 0.0
  %654 = vmatpush1.msra.mxu0 0.0
  %655 = vmatprep.subr.mxu0 0.0
  %656 = vmatpush1.msra.mxu0 0.0
  %657 = vmatprep.subr.mxu0 0.0
  %658 = vmatpush1.msra.mxu0 0.0
  %659 = vmatprep.subr.mxu0 0.0
  %660 = vmatpush1.msra.mxu0 0.0
  %661 = vmatprep.subr.mxu0 0.0
  %662 = vmatpush1.msra.mxu0 0.0
  %663 = vmatprep.subr.mxu0 0.0
  %664 = vmatpush1.msra.mxu0 0.0
  %665 = vmatprep.subr.mxu0 0.0
  %666 = vmatpush1.msra.mxu0 0.0
  %667 = vmatprep.subr.mxu0 0.0
  %668 = vmatpush1.msra.mxu0 0.0
  %669 = vmatprep.subr.mxu0 0.0
  %670 = vmatpush1.msra.mxu0 0.0
  %671 = vmatprep.subr.mxu0 0.0
  %672 = vmatpush1.msra.mxu0 0.0
  %673 = vmatprep.subr.mxu0 0.0
  %674 = vmatpush1.msra.mxu0 0.0
  %675 = vmatprep.subr.mxu0 0.0
  %676 = vmatpush1.msra.mxu0 0.0
  %677 = vmatprep.subr.mxu0 0.0
  %678 = vmatpush1.msra.mxu0 0.0
  %679 = vmatprep.subr.mxu0 0.0
  %680 = vmatpush1.msra.mxu0 0.0
  %681 = vmatprep.mubr.f32.mxu0 0.0
  %682 = vmatmul.mubr.f32.gmra.mrb[0].mxu0 %v616
  %v683 = vpop.f32.mrb[0].mxu0
  %v684 = vadd.f32 0.0, %v683
  %v685 = vpop.f32.mrb[0].mxu0
  %686 = vdwg.mxu0
  %v687 = vadd.f32 %v160, %v684
  %v688 = vtanh.pop %v687
  %689 = vmatprep.subr.mxu0 0.0
  %690 = vmatpush1.msra.mxu0 %v168
  %691 = vmatprep.subr.mxu0 0.0
  %692 = vmatpush1.msra.mxu0 %v169
  %693 = vmatprep.subr.mxu0 0.0
  %694 = vmatpush1.msra.mxu0 %v170
  %695 = vmatprep.subr.mxu0 0.0
  %696 = vmatpush1.msra.mxu0 %v171
  %697 = vmatprep.subr.mxu0 0.0
  %698 = vmatpush1.msra.mxu0 %v172
  %699 = vmatprep.subr.mxu0 0.0
  %700 = vmatpush1.msra.mxu0 %v173
  %701 = vmatprep.subr.mxu0 0.0
  %702 = vmatpush1.msra.mxu0 %v174
  %703 = vmatprep.subr.mxu0 0.0
  %704 = vmatpush1.msra.mxu0 %v175
  %705 = vmatprep.subr.mxu0 0.0
  %706 = vmatpush1.msra.mxu0 %v176
  %707 = vmatprep.subr.mxu0 0.0
  %708 = vmatpush1.msra.mxu0 %v177
  %709 = vmatprep.subr.mxu0 0.0
  %710 = vmatpush1.msra.mxu0 %v178
  %711 = vmatprep.subr.mxu0 0.0
  %712 = vmatpush1.msra.mxu0 %v179
  %713 = vmatprep.subr.mxu0 0.0
  %714 = vmatpush1.msra.mxu0 %v180
  %715 = vmatprep.subr.mxu0 0.0
  %716 = vmatpush1.msra.mxu0 %v181
  %717 = vmatprep.subr.mxu0 0.0
  %718 = vmatpush1.msra.mxu0 %v182
  %719 = vmatprep.subr.mxu0 0.0
  %720 = vmatpush1.msra.mxu0 %v183
  %721 = vmatprep.subr.mxu0 0.0
  %722 = vmatpush1.msra.mxu0 0.0
  %723 = vmatprep.subr.mxu0 0.0
  %724 = vmatpush1.msra.mxu0 0.0
  %725 = vmatprep.subr.mxu0 0.0
  %726 = vmatpush1.msra.mxu0 0.0
  %727 = vmatprep.subr.mxu0 0.0
  %728 = vmatpush1.msra.mxu0 0.0
  %729 = vmatprep.subr.mxu0 0.0
  %730 = vmatpush1.msra.mxu0 0.0
  %731 = vmatprep.subr.mxu0 0.0
  %732 = vmatpush1.msra.mxu0 0.0
  %733 = vmatprep.subr.mxu0 0.0
  %734 = vmatpush1.msra.mxu0 0.0
  %735 = vmatprep.subr.mxu0 0.0
  %736 = vmatpush1.msra.mxu0 0.0
  %737 = vmatprep.subr.mxu0 0.0
  %738 = vmatpush1.msra.mxu0 0.0
  %739 = vmatprep.subr.mxu0 0.0
  %740 = vmatpush1.msra.mxu0 0.0
  %741 = vmatprep.subr.mxu0 0.0
  %742 = vmatpush1.msra.mxu0 0.0
  %743 = vmatprep.subr.mxu0 0.0
  %744 = vmatpush1.msra.mxu0 0.0
  %745 = vmatprep.subr.mxu0 0.0
  %746 = vmatpush1.msra.mxu0 0.0
  %747 = vmatprep.subr.mxu0 0.0
  %748 = vmatpush1.msra.mxu0 0.0
  %749 = vmatprep.subr.mxu0 0.0
  %750 = vmatpush1.msra.mxu0 0.0
  %751 = vmatprep.subr.mxu0 0.0
  %752 = vmatpush1.msra.mxu0 0.0
  %753 = vmatprep.mubr.f32.mxu0 0.0
  %754 = vmatmul.mubr.f32.gmra.mrb[0].mxu0 %v688
  %v755 = vpop.f32.mrb[0].mxu0
  %v756 = vadd.f32 0.0, %v755
  %v757 = vpop.f32.mrb[0].mxu0
  %758 = vdwg.mxu0
  %v759 = vadd.f32 %v165, %v756
  %v760 = vtanh.pop %v759
  %761 = vst [vmem:[#allocation2] sm:$0xff] %v760
  %v762 = vld [vmem:[%s2] sm:$0xff]
  %v763 = vld [vmem:[%s2 + $0x8] sm:$0xff]
  %v764 = vld [vmem:[%s2 + $0x10] sm:$0xff]
  %v765 = vld [vmem:[%s2 + $0x18] sm:$0xff]
  %v766 = vld [vmem:[%s2 + $0x20] sm:$0xff]
  %v767 = vld [vmem:[%s2 + $0x28] sm:$0xff]
  %v768 = vld [vmem:[%s2 + $0x30] sm:$0xff]
  %v769 = vld [vmem:[%s2 + $0x38] sm:$0xff]
  %v770 = vld [vmem:[%s2 + $0x40] sm:$0xff]
  %v771 = vld [vmem:[%s2 + $0x48] sm:$0xff]
  %v772 = vld [vmem:[%s2 + $0x50] sm:$0xff]
  %v773 = vld [vmem:[%s2 + $0x58] sm:$0xff]
  %v774 = vld [vmem:[%s2 + $0x60] sm:$0xff]
  %v775 = vld [vmem:[%s2 + $0x68] sm:$0xff]
  %v776 = vld [vmem:[%s2 + $0x70] sm:$0xff]
  %v777 = vld [vmem:[%s2 + $0x78] sm:$0xff]
  %s778 = scalar_lea.vmem %s4, 1
  %v779 = vld [vmem:[%s778] sm:$0x1]
  %v781 = vlaneseq
  %v782 = vshrl.u32 %v781, 7
  %v783 = vsub.s32 0, %v782
  %v784 = vrot.slane %v779, %v783
  %786 = vmatprep.subr.mxu0 0.0
  %787 = vmatpush1.msra.mxu0 %v762
  %788 = vmatprep.subr.mxu0 0.0
  %789 = vmatpush1.msra.mxu0 %v763
  %790 = vmatprep.subr.mxu0 0.0
  %791 = vmatpush1.msra.mxu0 %v764
  %792 = vmatprep.subr.mxu0 0.0
  %793 = vmatpush1.msra.mxu0 %v765
  %794 = vmatprep.subr.mxu0 0.0
  %795 = vmatpush1.msra.mxu0 %v766
  %796 = vmatprep.subr.mxu0 0.0
  %797 = vmatpush1.msra.mxu0 %v767
  %798 = vmatprep.subr.mxu0 0.0
  %799 = vmatpush1.msra.mxu0 %v768
  %800 = vmatprep.subr.mxu0 0.0
  %801 = vmatpush1.msra.mxu0 %v769
  %802 = vmatprep.subr.mxu0 0.0
  %803 = vmatpush1.msra.mxu0 %v770
  %804 = vmatprep.subr.mxu0 0.0
  %805 = vmatpush1.msra.mxu0 %v771
  %806 = vmatprep.subr.mxu0 0.0
  %807 = vmatpush1.msra.mxu0 %v772
  %808 = vmatprep.subr.mxu0 0.0
  %809 = vmatpush1.msra.mxu0 %v773
  %810 = vmatprep.subr.mxu0 0.0
  %811 = vmatpush1.msra.mxu0 %v774
  %812 = vmatprep.subr.mxu0 0.0
  %813 = vmatpush1.msra.mxu0 %v775
  %814 = vmatprep.subr.mxu0 0.0
  %815 = vmatpush1.msra.mxu0 %v776
  %816 = vmatprep.subr.mxu0 0.0
  %817 = vmatpush1.msra.mxu0 %v777
  %818 = vmatprep.subr.mxu0 0.0
  %819 = vmatpush1.msra.mxu0 0.0
  %820 = vmatprep.subr.mxu0 0.0
  %821 = vmatpush1.msra.mxu0 0.0
  %822 = vmatprep.subr.mxu0 0.0
  %823 = vmatpush1.msra.mxu0 0.0
  %824 = vmatprep.subr.mxu0 0.0
  %825 = vmatpush1.msra.mxu0 0.0
  %826 = vmatprep.subr.mxu0 0.0
  %827 = vmatpush1.msra.mxu0 0.0
  %828 = vmatprep.subr.mxu0 0.0
  %829 = vmatpush1.msra.mxu0 0.0
  %830 = vmatprep.subr.mxu0 0.0
  %831 = vmatpush1.msra.mxu0 0.0
  %832 = vmatprep.subr.mxu0 0.0
  %833 = vmatpush1.msra.mxu0 0.0
  %834 = vmatprep.subr.mxu0 0.0
  %835 = vmatpush1.msra.mxu0 0.0
  %836 = vmatprep.subr.mxu0 0.0
  %837 = vmatpush1.msra.mxu0 0.0
  %838 = vmatprep.subr.mxu0 0.0
  %839 = vmatpush1.msra.mxu0 0.0
  %840 = vmatprep.subr.mxu0 0.0
  %841 = vmatpush1.msra.mxu0 0.0
  %842 = vmatprep.subr.mxu0 0.0
  %843 = vmatpush1.msra.mxu0 0.0
  %844 = vmatprep.subr.mxu0 0.0
  %845 = vmatpush1.msra.mxu0 0.0
  %846 = vmatprep.subr.mxu0 0.0
  %847 = vmatpush1.msra.mxu0 0.0
  %848 = vmatprep.subr.mxu0 0.0
  %849 = vmatpush1.msra.mxu0 0.0
  %850 = vmatprep.mubr.f32.mxu0 0.0
  %851 = vmatmul.mubr.f32.gmra.mrb[0].mxu0 %v256
  %v852 = vpop.f32.mrb[0].mxu0
  %v853 = vadd.f32 %v784, %v852
  %v854 = vpop.f32.mrb[0].mxu0
  %855 = vmatprep.mubr.f32.mxu0 0.0
  %856 = vmatmul.mubr.f32.gmra.mrb[0].mxu0 %v328
  %v857 = vpop.f32.mrb[0].mxu0
  %v858 = vadd.f32 %v784, %v857
  %v859 = vpop.f32.mrb[0].mxu0
  %860 = vmatprep.mubr.f32.mxu0 0.0
  %861 = vmatmul.mubr.f32.gmra.mrb[0].mxu0 %v400
  %v862 = vpop.f32.mrb[0].mxu0
  %v863 = vadd.f32 %v784, %v862
  %v864 = vpop.f32.mrb[0].mxu0
  %865 = vmatprep.mubr.f32.mxu0 0.0
  %866 = vmatmul.mubr.f32.gmra.mrb[0].mxu0 %v472
  %v867 = vpop.f32.mrb[0].mxu0
  %v868 = vadd.f32 %v784, %v867
  %v869 = vpop.f32.mrb[0].mxu0
  %870 = vmatprep.mubr.f32.mxu0 0.0
  %871 = vmatmul.mubr.f32.gmra.mrb[0].mxu0 %v544
  %v872 = vpop.f32.mrb[0].mxu0
  %v873 = vadd.f32 %v784, %v872
  %v874 = vpop.f32.mrb[0].mxu0
  %875 = vmatprep.mubr.f32.mxu0 0.0
  %876 = vmatmul.mubr.f32.gmra.mrb[0].mxu0 %v616
  %v877 = vpop.f32.mrb[0].mxu0
  %v878 = vadd.f32 %v784, %v877
  %v879 = vpop.f32.mrb[0].mxu0
  %880 = vmatprep.mubr.f32.mxu0 0.0
  %881 = vmatmul.mubr.f32.gmra.mrb[0].mxu0 %v688
  %v882 = vpop.f32.mrb[0].mxu0
  %v883 = vadd.f32 %v784, %v882
  %v884 = vpop.f32.mrb[0].mxu0
  %885 = vmatprep.mubr.f32.mxu0 0.0
  %886 = vmatmul.mubr.f32.gmra.mrb[0].mxu0 %v760
  %v887 = vpop.f32.mrb[0].mxu0
  %v888 = vadd.f32 %v784, %v887
  %v889 = vpop.f32.mrb[0].mxu0
  %890 = vdwg.mxu0
  %s891 = scalar_lea.vmem %s3, 128
  %v892 = vld [vmem:[%s891] sm:$0xff]
  %v893 = vld [vmem:[%s891 + $0x8] sm:$0xff]
  %v894 = vld [vmem:[%s891 + $0x10] sm:$0xff]
  %v895 = vld [vmem:[%s891 + $0x18] sm:$0xff]
  %v896 = vld [vmem:[%s891 + $0x20] sm:$0xff]
  %v897 = vld [vmem:[%s891 + $0x28] sm:$0xff]
  %v898 = vld [vmem:[%s891 + $0x30] sm:$0xff]
  %v899 = vld [vmem:[%s891 + $0x38] sm:$0xff]
  %v900 = vld [vmem:[%s891 + $0x40] sm:$0xff]
  %v901 = vld [vmem:[%s891 + $0x48] sm:$0xff]
  %v902 = vld [vmem:[%s891 + $0x50] sm:$0xff]
  %v903 = vld [vmem:[%s891 + $0x58] sm:$0xff]
  %v904 = vld [vmem:[%s891 + $0x60] sm:$0xff]
  %v905 = vld [vmem:[%s891 + $0x68] sm:$0xff]
  %v906 = vld [vmem:[%s891 + $0x70] sm:$0xff]
  %v907 = vld [vmem:[%s891 + $0x78] sm:$0xff]
  %s908 = scalar_lea.vmem [#allocation2], 8
  %v909 = vld [vmem:[%s908] sm:$0xff]
  %910 = vmatprep.subr.mxu0 0.0
  %911 = vmatpush1.msra.mxu0 %v892
  %912 = vmatprep.subr.mxu0 0.0
  %913 = vmatpush1.msra.mxu0 %v893
  %914 = vmatprep.subr.mxu0 0.0
  %915 = vmatpush1.msra.mxu0 %v894
  %916 = vmatprep.subr.mxu0 0.0
  %917 = vmatpush1.msra.mxu0 %v895
  %918 = vmatprep.subr.mxu0 0.0
  %919 = vmatpush1.msra.mxu0 %v896
  %920 = vmatprep.subr.mxu0 0.0
  %921 = vmatpush1.msra.mxu0 %v897
  %922 = vmatprep.subr.mxu0 0.0
  %923 = vmatpush1.msra.mxu0 %v898
  %924 = vmatprep.subr.mxu0 0.0
  %925 = vmatpush1.msra.mxu0 %v899
  %926 = vmatprep.subr.mxu0 0.0
  %927 = vmatpush1.msra.mxu0 %v900
  %928 = vmatprep.subr.mxu0 0.0
  %929 = vmatpush1.msra.mxu0 %v901
  %930 = vmatprep.subr.mxu0 0.0
  %931 = vmatpush1.msra.mxu0 %v902
  %932 = vmatprep.subr.mxu0 0.0
  %933 = vmatpush1.msra.mxu0 %v903
  %934 = vmatprep.subr.mxu0 0.0
  %935 = vmatpush1.msra.mxu0 %v904
  %936 = vmatprep.subr.mxu0 0.0
  %937 = vmatpush1.msra.mxu0 %v905
  %938 = vmatprep.subr.mxu0 0.0
  %939 = vmatpush1.msra.mxu0 %v906
  %940 = vmatprep.subr.mxu0 0.0
  %941 = vmatpush1.msra.mxu0 %v907
  %942 = vmatprep.subr.mxu0 0.0
  %943 = vmatpush1.msra.mxu0 0.0
  %944 = vmatprep.subr.mxu0 0.0
  %945 = vmatpush1.msra.mxu0 0.0
  %946 = vmatprep.subr.mxu0 0.0
  %947 = vmatpush1.msra.mxu0 0.0
  %948 = vmatprep.subr.mxu0 0.0
  %949 = vmatpush1.msra.mxu0 0.0
  %950 = vmatprep.subr.mxu0 0.0
  %951 = vmatpush1.msra.mxu0 0.0
  %952 = vmatprep.subr.mxu0 0.0
  %953 = vmatpush1.msra.mxu0 0.0
  %954 = vmatprep.subr.mxu0 0.0
  %955 = vmatpush1.msra.mxu0 0.0
  %956 = vmatprep.subr.mxu0 0.0
  %957 = vmatpush1.msra.mxu0 0.0
  %958 = vmatprep.subr.mxu0 0.0
  %959 = vmatpush1.msra.mxu0 0.0
  %960 = vmatprep.subr.mxu0 0.0
  %961 = vmatpush1.msra.mxu0 0.0
  %962 = vmatprep.subr.mxu0 0.0
  %963 = vmatpush1.msra.mxu0 0.0
  %964 = vmatprep.subr.mxu0 0.0
  %965 = vmatpush1.msra.mxu0 0.0
  %966 = vmatprep.subr.mxu0 0.0
  %967 = vmatpush1.msra.mxu0 0.0
  %968 = vmatprep.subr.mxu0 0.0
  %969 = vmatpush1.msra.mxu0 0.0
  %970 = vmatprep.subr.mxu0 0.0
  %971 = vmatpush1.msra.mxu0 0.0
  %972 = vmatprep.subr.mxu0 0.0
  %973 = vmatpush1.msra.mxu0 0.0
  %974 = vmatprep.mubr.f32.mxu0 0.0
  %975 = vmatmul.mubr.f32.gmra.mrb[0].mxu0 %v909
  %v976 = vpop.f32.mrb[0].mxu0
  %v977 = vadd.f32 0.0, %v976
  %v978 = vpop.f32.mrb[0].mxu0
  %979 = vdwg.mxu0
  %v980 = vadd.f32 %v853, %v977
  %v981 = vtanh.pop %v980
  %982 = vmatprep.subr.mxu0 0.0
  %983 = vmatpush1.msra.mxu0 %v892
  %984 = vmatprep.subr.mxu0 0.0
  %985 = vmatpush1.msra.mxu0 %v893
  %986 = vmatprep.subr.mxu0 0.0
  %987 = vmatpush1.msra.mxu0 %v894
  %988 = vmatprep.subr.mxu0 0.0
  %989 = vmatpush1.msra.mxu0 %v895
  %990 = vmatprep.subr.mxu0 0.0
  %991 = vmatpush1.msra.mxu0 %v896
  %992 = vmatprep.subr.mxu0 0.0
  %993 = vmatpush1.msra.mxu0 %v897
  %994 = vmatprep.subr.mxu0 0.0
  %995 = vmatpush1.msra.mxu0 %v898
  %996 = vmatprep.subr.mxu0 0.0
  %997 = vmatpush1.msra.mxu0 %v899
  %998 = vmatprep.subr.mxu0 0.0
  %999 = vmatpush1.msra.mxu0 %v900
  %1000 = vmatprep.subr.mxu0 0.0
  %1001 = vmatpush1.msra.mxu0 %v901
  %1002 = vmatprep.subr.mxu0 0.0
  %1003 = vmatpush1.msra.mxu0 %v902
  %1004 = vmatprep.subr.mxu0 0.0
  %1005 = vmatpush1.msra.mxu0 %v903
  %1006 = vmatprep.subr.mxu0 0.0
  %1007 = vmatpush1.msra.mxu0 %v904
  %1008 = vmatprep.subr.mxu0 0.0
  %1009 = vmatpush1.msra.mxu0 %v905
  %1010 = vmatprep.subr.mxu0 0.0
  %1011 = vmatpush1.msra.mxu0 %v906
  %1012 = vmatprep.subr.mxu0 0.0
  %1013 = vmatpush1.msra.mxu0 %v907
  %1014 = vmatprep.subr.mxu0 0.0
  %1015 = vmatpush1.msra.mxu0 0.0
  %1016 = vmatprep.subr.mxu0 0.0
  %1017 = vmatpush1.msra.mxu0 0.0
  %1018 = vmatprep.subr.mxu0 0.0
  %1019 = vmatpush1.msra.mxu0 0.0
  %1020 = vmatprep.subr.mxu0 0.0
  %1021 = vmatpush1.msra.mxu0 0.0
  %1022 = vmatprep.subr.mxu0 0.0
  %1023 = vmatpush1.msra.mxu0 0.0
  %1024 = vmatprep.subr.mxu0 0.0
  %1025 = vmatpush1.msra.mxu0 0.0
  %1026 = vmatprep.subr.mxu0 0.0
  %1027 = vmatpush1.msra.mxu0 0.0
  %1028 = vmatprep.subr.mxu0 0.0
  %1029 = vmatpush1.msra.mxu0 0.0
  %1030 = vmatprep.subr.mxu0 0.0
  %1031 = vmatpush1.msra.mxu0 0.0
  %1032 = vmatprep.subr.mxu0 0.0
  %1033 = vmatpush1.msra.mxu0 0.0
  %1034 = vmatprep.subr.mxu0 0.0
  %1035 = vmatpush1.msra.mxu0 0.0
  %1036 = vmatprep.subr.mxu0 0.0
  %1037 = vmatpush1.msra.mxu0 0.0
  %1038 = vmatprep.subr.mxu0 0.0
  %1039 = vmatpush1.msra.mxu0 0.0
  %1040 = vmatprep.subr.mxu0 0.0
  %1041 = vmatpush1.msra.mxu0 0.0
  %1042 = vmatprep.subr.mxu0 0.0
  %1043 = vmatpush1.msra.mxu0 0.0
  %1044 = vmatprep.subr.mxu0 0.0
  %1045 = vmatpush1.msra.mxu0 0.0
  %1046 = vmatprep.mubr.f32.mxu0 0.0
  %1047 = vmatmul.mubr.f32.gmra.mrb[0].mxu0 %v981
  %v1048 = vpop.f32.mrb[0].mxu0
  %v1049 = vadd.f32 0.0, %v1048
  %v1050 = vpop.f32.mrb[0].mxu0
  %1051 = vdwg.mxu0
  %v1052 = vadd.f32 %v858, %v1049
  %v1053 = vtanh.pop %v1052
  %1054 = vmatprep.subr.mxu0 0.0
  %1055 = vmatpush1.msra.mxu0 %v892
  %1056 = vmatprep.subr.mxu0 0.0
  %1057 = vmatpush1.msra.mxu0 %v893
  %1058 = vmatprep.subr.mxu0 0.0
  %1059 = vmatpush1.msra.mxu0 %v894
  %1060 = vmatprep.subr.mxu0 0.0
  %1061 = vmatpush1.msra.mxu0 %v895
  %1062 = vmatprep.subr.mxu0 0.0
  %1063 = vmatpush1.msra.mxu0 %v896
  %1064 = vmatprep.subr.mxu0 0.0
  %1065 = vmatpush1.msra.mxu0 %v897
  %1066 = vmatprep.subr.mxu0 0.0
  %1067 = vmatpush1.msra.mxu0 %v898
  %1068 = vmatprep.subr.mxu0 0.0
  %1069 = vmatpush1.msra.mxu0 %v899
  %1070 = vmatprep.subr.mxu0 0.0
  %1071 = vmatpush1.msra.mxu0 %v900
  %1072 = vmatprep.subr.mxu0 0.0
  %1073 = vmatpush1.msra.mxu0 %v901
  %1074 = vmatprep.subr.mxu0 0.0
  %1075 = vmatpush1.msra.mxu0 %v902
  %1076 = vmatprep.subr.mxu0 0.0
  %1077 = vmatpush1.msra.mxu0 %v903
  %1078 = vmatprep.subr.mxu0 0.0
  %1079 = vmatpush1.msra.mxu0 %v904
  %1080 = vmatprep.subr.mxu0 0.0
  %1081 = vmatpush1.msra.mxu0 %v905
  %1082 = vmatprep.subr.mxu0 0.0
  %1083 = vmatpush1.msra.mxu0 %v906
  %1084 = vmatprep.subr.mxu0 0.0
  %1085 = vmatpush1.msra.mxu0 %v907
  %1086 = vmatprep.subr.mxu0 0.0
  %1087 = vmatpush1.msra.mxu0 0.0
  %1088 = vmatprep.subr.mxu0 0.0
  %1089 = vmatpush1.msra.mxu0 0.0
  %1090 = vmatprep.subr.mxu0 0.0
  %1091 = vmatpush1.msra.mxu0 0.0
  %1092 = vmatprep.subr.mxu0 0.0
  %1093 = vmatpush1.msra.mxu0 0.0
  %1094 = vmatprep.subr.mxu0 0.0
  %1095 = vmatpush1.msra.mxu0 0.0
  %1096 = vmatprep.subr.mxu0 0.0
  %1097 = vmatpush1.msra.mxu0 0.0
  %1098 = vmatprep.subr.mxu0 0.0
  %1099 = vmatpush1.msra.mxu0 0.0
  %1100 = vmatprep.subr.mxu0 0.0
  %1101 = vmatpush1.msra.mxu0 0.0
  %1102 = vmatprep.subr.mxu0 0.0
  %1103 = vmatpush1.msra.mxu0 0.0
  %1104 = vmatprep.subr.mxu0 0.0
  %1105 = vmatpush1.msra.mxu0 0.0
  %1106 = vmatprep.subr.mxu0 0.0
  %1107 = vmatpush1.msra.mxu0 0.0
  %1108 = vmatprep.subr.mxu0 0.0
  %1109 = vmatpush1.msra.mxu0 0.0
  %1110 = vmatprep.subr.mxu0 0.0
  %1111 = vmatpush1.msra.mxu0 0.0
  %1112 = vmatprep.subr.mxu0 0.0
  %1113 = vmatpush1.msra.mxu0 0.0
  %1114 = vmatprep.subr.mxu0 0.0
  %1115 = vmatpush1.msra.mxu0 0.0
  %1116 = vmatprep.subr.mxu0 0.0
  %1117 = vmatpush1.msra.mxu0 0.0
  %1118 = vmatprep.mubr.f32.mxu0 0.0
  %1119 = vmatmul.mubr.f32.gmra.mrb[0].mxu0 %v1053
  %v1120 = vpop.f32.mrb[0].mxu0
  %v1121 = vadd.f32 0.0, %v1120
  %v1122 = vpop.f32.mrb[0].mxu0
  %1123 = vdwg.mxu0
  %v1124 = vadd.f32 %v863, %v1121
  %v1125 = vtanh.pop %v1124
  %1126 = vmatprep.subr.mxu0 0.0
  %1127 = vmatpush1.msra.mxu0 %v892
  %1128 = vmatprep.subr.mxu0 0.0
  %1129 = vmatpush1.msra.mxu0 %v893
  %1130 = vmatprep.subr.mxu0 0.0
  %1131 = vmatpush1.msra.mxu0 %v894
  %1132 = vmatprep.subr.mxu0 0.0
  %1133 = vmatpush1.msra.mxu0 %v895
  %1134 = vmatprep.subr.mxu0 0.0
  %1135 = vmatpush1.msra.mxu0 %v896
  %1136 = vmatprep.subr.mxu0 0.0
  %1137 = vmatpush1.msra.mxu0 %v897
  %1138 = vmatprep.subr.mxu0 0.0
  %1139 = vmatpush1.msra.mxu0 %v898
  %1140 = vmatprep.subr.mxu0 0.0
  %1141 = vmatpush1.msra.mxu0 %v899
  %1142 = vmatprep.subr.mxu0 0.0
  %1143 = vmatpush1.msra.mxu0 %v900
  %1144 = vmatprep.subr.mxu0 0.0
  %1145 = vmatpush1.msra.mxu0 %v901
  %1146 = vmatprep.subr.mxu0 0.0
  %1147 = vmatpush1.msra.mxu0 %v902
  %1148 = vmatprep.subr.mxu0 0.0
  %1149 = vmatpush1.msra.mxu0 %v903
  %1150 = vmatprep.subr.mxu0 0.0
  %1151 = vmatpush1.msra.mxu0 %v904
  %1152 = vmatprep.subr.mxu0 0.0
  %1153 = vmatpush1.msra.mxu0 %v905
  %1154 = vmatprep.subr.mxu0 0.0
  %1155 = vmatpush1.msra.mxu0 %v906
  %1156 = vmatprep.subr.mxu0 0.0
  %1157 = vmatpush1.msra.mxu0 %v907
  %1158 = vmatprep.subr.mxu0 0.0
  %1159 = vmatpush1.msra.mxu0 0.0
  %1160 = vmatprep.subr.mxu0 0.0
  %1161 = vmatpush1.msra.mxu0 0.0
  %1162 = vmatprep.subr.mxu0 0.0
  %1163 = vmatpush1.msra.mxu0 0.0
  %1164 = vmatprep.subr.mxu0 0.0
  %1165 = vmatpush1.msra.mxu0 0.0
  %1166 = vmatprep.subr.mxu0 0.0
  %1167 = vmatpush1.msra.mxu0 0.0
  %1168 = vmatprep.subr.mxu0 0.0
  %1169 = vmatpush1.msra.mxu0 0.0
  %1170 = vmatprep.subr.mxu0 0.0
  %1171 = vmatpush1.msra.mxu0 0.0
  %1172 = vmatprep.subr.mxu0 0.0
  %1173 = vmatpush1.msra.mxu0 0.0
  %1174 = vmatprep.subr.mxu0 0.0
  %1175 = vmatpush1.msra.mxu0 0.0
  %1176 = vmatprep.subr.mxu0 0.0
  %1177 = vmatpush1.msra.mxu0 0.0
  %1178 = vmatprep.subr.mxu0 0.0
  %1179 = vmatpush1.msra.mxu0 0.0
  %1180 = vmatprep.subr.mxu0 0.0
  %1181 = vmatpush1.msra.mxu0 0.0
  %1182 = vmatprep.subr.mxu0 0.0
  %1183 = vmatpush1.msra.mxu0 0.0
  %1184 = vmatprep.subr.mxu0 0.0
  %1185 = vmatpush1.msra.mxu0 0.0
  %1186 = vmatprep.subr.mxu0 0.0
  %1187 = vmatpush1.msra.mxu0 0.0
  %1188 = vmatprep.subr.mxu0 0.0
  %1189 = vmatpush1.msra.mxu0 0.0
  %1190 = vmatprep.mubr.f32.mxu0 0.0
  %1191 = vmatmul.mubr.f32.gmra.mrb[0].mxu0 %v1125
  %v1192 = vpop.f32.mrb[0].mxu0
  %v1193 = vadd.f32 0.0, %v1192
  %v1194 = vpop.f32.mrb[0].mxu0
  %1195 = vdwg.mxu0
  %v1196 = vadd.f32 %v868, %v1193
  %v1197 = vtanh.pop %v1196
  %1198 = vmatprep.subr.mxu0 0.0
  %1199 = vmatpush1.msra.mxu0 %v892
  %1200 = vmatprep.subr.mxu0 0.0
  %1201 = vmatpush1.msra.mxu0 %v893
  %1202 = vmatprep.subr.mxu0 0.0
  %1203 = vmatpush1.msra.mxu0 %v894
  %1204 = vmatprep.subr.mxu0 0.0
  %1205 = vmatpush1.msra.mxu0 %v895
  %1206 = vmatprep.subr.mxu0 0.0
  %1207 = vmatpush1.msra.mxu0 %v896
  %1208 = vmatprep.subr.mxu0 0.0
  %1209 = vmatpush1.msra.mxu0 %v897
  %1210 = vmatprep.subr.mxu0 0.0
  %1211 = vmatpush1.msra.mxu0 %v898
  %1212 = vmatprep.subr.mxu0 0.0
  %1213 = vmatpush1.msra.mxu0 %v899
  %1214 = vmatprep.subr.mxu0 0.0
  %1215 = vmatpush1.msra.mxu0 %v900
  %1216 = vmatprep.subr.mxu0 0.0
  %1217 = vmatpush1.msra.mxu0 %v901
  %1218 = vmatprep.subr.mxu0 0.0
  %1219 = vmatpush1.msra.mxu0 %v902
  %1220 = vmatprep.subr.mxu0 0.0
  %1221 = vmatpush1.msra.mxu0 %v903
  %1222 = vmatprep.subr.mxu0 0.0
  %1223 = vmatpush1.msra.mxu0 %v904
  %1224 = vmatprep.subr.mxu0 0.0
  %1225 = vmatpush1.msra.mxu0 %v905
  %1226 = vmatprep.subr.mxu0 0.0
  %1227 = vmatpush1.msra.mxu0 %v906
  %1228 = vmatprep.subr.mxu0 0.0
  %1229 = vmatpush1.msra.mxu0 %v907
  %1230 = vmatprep.subr.mxu0 0.0
  %1231 = vmatpush1.msra.mxu0 0.0
  %1232 = vmatprep.subr.mxu0 0.0
  %1233 = vmatpush1.msra.mxu0 0.0
  %1234 = vmatprep.subr.mxu0 0.0
  %1235 = vmatpush1.msra.mxu0 0.0
  %1236 = vmatprep.subr.mxu0 0.0
  %1237 = vmatpush1.msra.mxu0 0.0
  %1238 = vmatprep.subr.mxu0 0.0
  %1239 = vmatpush1.msra.mxu0 0.0
  %1240 = vmatprep.subr.mxu0 0.0
  %1241 = vmatpush1.msra.mxu0 0.0
  %1242 = vmatprep.subr.mxu0 0.0
  %1243 = vmatpush1.msra.mxu0 0.0
  %1244 = vmatprep.subr.mxu0 0.0
  %1245 = vmatpush1.msra.mxu0 0.0
  %1246 = vmatprep.subr.mxu0 0.0
  %1247 = vmatpush1.msra.mxu0 0.0
  %1248 = vmatprep.subr.mxu0 0.0
  %1249 = vmatpush1.msra.mxu0 0.0
  %1250 = vmatprep.subr.mxu0 0.0
  %1251 = vmatpush1.msra.mxu0 0.0
  %1252 = vmatprep.subr.mxu0 0.0
  %1253 = vmatpush1.msra.mxu0 0.0
  %1254 = vmatprep.subr.mxu0 0.0
  %1255 = vmatpush1.msra.mxu0 0.0
  %1256 = vmatprep.subr.mxu0 0.0
  %1257 = vmatpush1.msra.mxu0 0.0
  %1258 = vmatprep.subr.mxu0 0.0
  %1259 = vmatpush1.msra.mxu0 0.0
  %1260 = vmatprep.subr.mxu0 0.0
  %1261 = vmatpush1.msra.mxu0 0.0
  %1262 = vmatprep.mubr.f32.mxu0 0.0
  %1263 = vmatmul.mubr.f32.gmra.mrb[0].mxu0 %v1197
  %v1264 = vpop.f32.mrb[0].mxu0
  %v1265 = vadd.f32 0.0, %v1264
  %v1266 = vpop.f32.mrb[0].mxu0
  %1267 = vdwg.mxu0
  %v1268 = vadd.f32 %v873, %v1265
  %v1269 = vtanh.pop %v1268
  %1270 = vmatprep.subr.mxu0 0.0
  %1271 = vmatpush1.msra.mxu0 %v892
  %1272 = vmatprep.subr.mxu0 0.0
  %1273 = vmatpush1.msra.mxu0 %v893
  %1274 = vmatprep.subr.mxu0 0.0
  %1275 = vmatpush1.msra.mxu0 %v894
  %1276 = vmatprep.subr.mxu0 0.0
  %1277 = vmatpush1.msra.mxu0 %v895
  %1278 = vmatprep.subr.mxu0 0.0
  %1279 = vmatpush1.msra.mxu0 %v896
  %1280 = vmatprep.subr.mxu0 0.0
  %1281 = vmatpush1.msra.mxu0 %v897
  %1282 = vmatprep.subr.mxu0 0.0
  %1283 = vmatpush1.msra.mxu0 %v898
  %1284 = vmatprep.subr.mxu0 0.0
  %1285 = vmatpush1.msra.mxu0 %v899
  %1286 = vmatprep.subr.mxu0 0.0
  %1287 = vmatpush1.msra.mxu0 %v900
  %1288 = vmatprep.subr.mxu0 0.0
  %1289 = vmatpush1.msra.mxu0 %v901
  %1290 = vmatprep.subr.mxu0 0.0
  %1291 = vmatpush1.msra.mxu0 %v902
  %1292 = vmatprep.subr.mxu0 0.0
  %1293 = vmatpush1.msra.mxu0 %v903
  %1294 = vmatprep.subr.mxu0 0.0
  %1295 = vmatpush1.msra.mxu0 %v904
  %1296 = vmatprep.subr.mxu0 0.0
  %1297 = vmatpush1.msra.mxu0 %v905
  %1298 = vmatprep.subr.mxu0 0.0
  %1299 = vmatpush1.msra.mxu0 %v906
  %1300 = vmatprep.subr.mxu0 0.0
  %1301 = vmatpush1.msra.mxu0 %v907
  %1302 = vmatprep.subr.mxu0 0.0
  %1303 = vmatpush1.msra.mxu0 0.0
  %1304 = vmatprep.subr.mxu0 0.0
  %1305 = vmatpush1.msra.mxu0 0.0
  %1306 = vmatprep.subr.mxu0 0.0
  %1307 = vmatpush1.msra.mxu0 0.0
  %1308 = vmatprep.subr.mxu0 0.0
  %1309 = vmatpush1.msra.mxu0 0.0
  %1310 = vmatprep.subr.mxu0 0.0
  %1311 = vmatpush1.msra.mxu0 0.0
  %1312 = vmatprep.subr.mxu0 0.0
  %1313 = vmatpush1.msra.mxu0 0.0
  %1314 = vmatprep.subr.mxu0 0.0
  %1315 = vmatpush1.msra.mxu0 0.0
  %1316 = vmatprep.subr.mxu0 0.0
  %1317 = vmatpush1.msra.mxu0 0.0
  %1318 = vmatprep.subr.mxu0 0.0
  %1319 = vmatpush1.msra.mxu0 0.0
  %1320 = vmatprep.subr.mxu0 0.0
  %1321 = vmatpush1.msra.mxu0 0.0
  %1322 = vmatprep.subr.mxu0 0.0
  %1323 = vmatpush1.msra.mxu0 0.0
  %1324 = vmatprep.subr.mxu0 0.0
  %1325 = vmatpush1.msra.mxu0 0.0
  %1326 = vmatprep.subr.mxu0 0.0
  %1327 = vmatpush1.msra.mxu0 0.0
  %1328 = vmatprep.subr.mxu0 0.0
  %1329 = vmatpush1.msra.mxu0 0.0
  %1330 = vmatprep.subr.mxu0 0.0
  %1331 = vmatpush1.msra.mxu0 0.0
  %1332 = vmatprep.subr.mxu0 0.0
  %1333 = vmatpush1.msra.mxu0 0.0
  %1334 = vmatprep.mubr.f32.mxu0 0.0
  %1335 = vmatmul.mubr.f32.gmra.mrb[0].mxu0 %v1269
  %v1336 = vpop.f32.mrb[0].mxu0
  %v1337 = vadd.f32 0.0, %v1336
  %v1338 = vpop.f32.mrb[0].mxu0
  %1339 = vdwg.mxu0
  %v1340 = vadd.f32 %v878, %v1337
  %v1341 = vtanh.pop %v1340
  %1342 = vmatprep.subr.mxu0 0.0
  %1343 = vmatpush1.msra.mxu0 %v892
  %1344 = vmatprep.subr.mxu0 0.0
  %1345 = vmatpush1.msra.mxu0 %v893
  %1346 = vmatprep.subr.mxu0 0.0
  %1347 = vmatpush1.msra.mxu0 %v894
  %1348 = vmatprep.subr.mxu0 0.0
  %1349 = vmatpush1.msra.mxu0 %v895
  %1350 = vmatprep.subr.mxu0 0.0
  %1351 = vmatpush1.msra.mxu0 %v896
  %1352 = vmatprep.subr.mxu0 0.0
  %1353 = vmatpush1.msra.mxu0 %v897
  %1354 = vmatprep.subr.mxu0 0.0
  %1355 = vmatpush1.msra.mxu0 %v898
  %1356 = vmatprep.subr.mxu0 0.0
  %1357 = vmatpush1.msra.mxu0 %v899
  %1358 = vmatprep.subr.mxu0 0.0
  %1359 = vmatpush1.msra.mxu0 %v900
  %1360 = vmatprep.subr.mxu0 0.0
  %1361 = vmatpush1.msra.mxu0 %v901
  %1362 = vmatprep.subr.mxu0 0.0
  %1363 = vmatpush1.msra.mxu0 %v902
  %1364 = vmatprep.subr.mxu0 0.0
  %1365 = vmatpush1.msra.mxu0 %v903
  %1366 = vmatprep.subr.mxu0 0.0
  %1367 = vmatpush1.msra.mxu0 %v904
  %1368 = vmatprep.subr.mxu0 0.0
  %1369 = vmatpush1.msra.mxu0 %v905
  %1370 = vmatprep.subr.mxu0 0.0
  %1371 = vmatpush1.msra.mxu0 %v906
  %1372 = vmatprep.subr.mxu0 0.0
  %1373 = vmatpush1.msra.mxu0 %v907
  %1374 = vmatprep.subr.mxu0 0.0
  %1375 = vmatpush1.msra.mxu0 0.0
  %1376 = vmatprep.subr.mxu0 0.0
  %1377 = vmatpush1.msra.mxu0 0.0
  %1378 = vmatprep.subr.mxu0 0.0
  %1379 = vmatpush1.msra.mxu0 0.0
  %1380 = vmatprep.subr.mxu0 0.0
  %1381 = vmatpush1.msra.mxu0 0.0
  %1382 = vmatprep.subr.mxu0 0.0
  %1383 = vmatpush1.msra.mxu0 0.0
  %1384 = vmatprep.subr.mxu0 0.0
  %1385 = vmatpush1.msra.mxu0 0.0
  %1386 = vmatprep.subr.mxu0 0.0
  %1387 = vmatpush1.msra.mxu0 0.0
  %1388 = vmatprep.subr.mxu0 0.0
  %1389 = vmatpush1.msra.mxu0 0.0
  %1390 = vmatprep.subr.mxu0 0.0
  %1391 = vmatpush1.msra.mxu0 0.0
  %1392 = vmatprep.subr.mxu0 0.0
  %1393 = vmatpush1.msra.mxu0 0.0
  %1394 = vmatprep.subr.mxu0 0.0
  %1395 = vmatpush1.msra.mxu0 0.0
  %1396 = vmatprep.subr.mxu0 0.0
  %1397 = vmatpush1.msra.mxu0 0.0
  %1398 = vmatprep.subr.mxu0 0.0
  %1399 = vmatpush1.msra.mxu0 0.0
  %1400 = vmatprep.subr.mxu0 0.0
  %1401 = vmatpush1.msra.mxu0 0.0
  %1402 = vmatprep.subr.mxu0 0.0
  %1403 = vmatpush1.msra.mxu0 0.0
  %1404 = vmatprep.subr.mxu0 0.0
  %1405 = vmatpush1.msra.mxu0 0.0
  %1406 = vmatprep.mubr.f32.mxu0 0.0
  %1407 = vmatmul.mubr.f32.gmra.mrb[0].mxu0 %v1341
  %v1408 = vpop.f32.mrb[0].mxu0
  %v1409 = vadd.f32 0.0, %v1408
  %v1410 = vpop.f32.mrb[0].mxu0
  %1411 = vdwg.mxu0
  %v1412 = vadd.f32 %v883, %v1409
  %v1413 = vtanh.pop %v1412
  %1414 = vmatprep.subr.mxu0 0.0
  %1415 = vmatpush1.msra.mxu0 %v892
  %1416 = vmatprep.subr.mxu0 0.0
  %1417 = vmatpush1.msra.mxu0 %v893
  %1418 = vmatprep.subr.mxu0 0.0
  %1419 = vmatpush1.msra.mxu0 %v894
  %1420 = vmatprep.subr.mxu0 0.0
  %1421 = vmatpush1.msra.mxu0 %v895
  %1422 = vmatprep.subr.mxu0 0.0
  %1423 = vmatpush1.msra.mxu0 %v896
  %1424 = vmatprep.subr.mxu0 0.0
  %1425 = vmatpush1.msra.mxu0 %v897
  %1426 = vmatprep.subr.mxu0 0.0
  %1427 = vmatpush1.msra.mxu0 %v898
  %1428 = vmatprep.subr.mxu0 0.0
  %1429 = vmatpush1.msra.mxu0 %v899
  %1430 = vmatprep.subr.mxu0 0.0
  %1431 = vmatpush1.msra.mxu0 %v900
  %1432 = vmatprep.subr.mxu0 0.0
  %1433 = vmatpush1.msra.mxu0 %v901
  %1434 = vmatprep.subr.mxu0 0.0
  %1435 = vmatpush1.msra.mxu0 %v902
  %1436 = vmatprep.subr.mxu0 0.0
  %1437 = vmatpush1.msra.mxu0 %v903
  %1438 = vmatprep.subr.mxu0 0.0
  %1439 = vmatpush1.msra.mxu0 %v904
  %1440 = vmatprep.subr.mxu0 0.0
  %1441 = vmatpush1.msra.mxu0 %v905
  %1442 = vmatprep.subr.mxu0 0.0
  %1443 = vmatpush1.msra.mxu0 %v906
  %1444 = vmatprep.subr.mxu0 0.0
  %1445 = vmatpush1.msra.mxu0 %v907
  %1446 = vmatprep.subr.mxu0 0.0
  %1447 = vmatpush1.msra.mxu0 0.0
  %1448 = vmatprep.subr.mxu0 0.0
  %1449 = vmatpush1.msra.mxu0 0.0
  %1450 = vmatprep.subr.mxu0 0.0
  %1451 = vmatpush1.msra.mxu0 0.0
  %1452 = vmatprep.subr.mxu0 0.0
  %1453 = vmatpush1.msra.mxu0 0.0
  %1454 = vmatprep.subr.mxu0 0.0
  %1455 = vmatpush1.msra.mxu0 0.0
  %1456 = vmatprep.subr.mxu0 0.0
  %1457 = vmatpush1.msra.mxu0 0.0
  %1458 = vmatprep.subr.mxu0 0.0
  %1459 = vmatpush1.msra.mxu0 0.0
  %1460 = vmatprep.subr.mxu0 0.0
  %1461 = vmatpush1.msra.mxu0 0.0
  %1462 = vmatprep.subr.mxu0 0.0
  %1463 = vmatpush1.msra.mxu0 0.0
  %1464 = vmatprep.subr.mxu0 0.0
  %1465 = vmatpush1.msra.mxu0 0.0
  %1466 = vmatprep.subr.mxu0 0.0
  %1467 = vmatpush1.msra.mxu0 0.0
  %1468 = vmatprep.subr.mxu0 0.0
  %1469 = vmatpush1.msra.mxu0 0.0
  %1470 = vmatprep.subr.mxu0 0.0
  %1471 = vmatpush1.msra.mxu0 0.0
  %1472 = vmatprep.subr.mxu0 0.0
  %1473 = vmatpush1.msra.mxu0 0.0
  %1474 = vmatprep.subr.mxu0 0.0
  %1475 = vmatpush1.msra.mxu0 0.0
  %1476 = vmatprep.subr.mxu0 0.0
  %1477 = vmatpush1.msra.mxu0 0.0
  %1478 = vmatprep.mubr.f32.mxu0 0.0
  %1479 = vmatmul.mubr.f32.gmra.mrb[0].mxu0 %v1413
  %v1480 = vpop.f32.mrb[0].mxu0
  %v1481 = vadd.f32 0.0, %v1480
  %v1482 = vpop.f32.mrb[0].mxu0
  %1483 = vdwg.mxu0
  %v1484 = vadd.f32 %v888, %v1481
  %v1485 = vtanh.pop %v1484
  %1486 = vst [vmem:[%s908] sm:$0xff] %v1485
  %v1487 = vld [vmem:[%s5] sm:$0xff]
  %v1488 = vld [vmem:[%s5 + $0x8] sm:$0xff]
  %v1489 = vld [vmem:[%s5 + $0x10] sm:$0xff]
  %v1490 = vld [vmem:[%s5 + $0x18] sm:$0xff]
  %v1491 = vld [vmem:[%s5 + $0x20] sm:$0xff]
  %v1492 = vld [vmem:[%s5 + $0x28] sm:$0xff]
  %v1493 = vld [vmem:[%s5 + $0x30] sm:$0xff]
  %v1494 = vld [vmem:[%s5 + $0x38] sm:$0xff]
  %v1495 = vld [vmem:[%s5 + $0x40] sm:$0xff]
  %v1496 = vld [vmem:[%s5 + $0x48] sm:$0xff]
  %v1497 = vld [vmem:[%s5 + $0x50] sm:$0xff]
  %v1498 = vld [vmem:[%s5 + $0x58] sm:$0xff]
  %v1499 = vld [vmem:[%s5 + $0x60] sm:$0xff]
  %v1500 = vld [vmem:[%s5 + $0x68] sm:$0xff]
  %v1501 = vld [vmem:[%s5 + $0x70] sm:$0xff]
  %v1502 = vld [vmem:[%s5 + $0x78] sm:$0xff]
  %v1503 = vld [vmem:[%s6] sm:$0x1]
  %v1505 = vlaneseq
  %v1506 = vshrl.u32 %v1505, 7
  %v1507 = vsub.s32 0, %v1506
  %v1508 = vrot.slane %v1503, %v1507
  %1510 = vmatprep.subr.mxu0 0.0
  %1511 = vmatpush1.msra.mxu0 %v1487
  %1512 = vmatprep.subr.mxu0 0.0
  %1513 = vmatpush1.msra.mxu0 %v1488
  %1514 = vmatprep.subr.mxu0 0.0
  %1515 = vmatpush1.msra.mxu0 %v1489
  %1516 = vmatprep.subr.mxu0 0.0
  %1517 = vmatpush1.msra.mxu0 %v1490
  %1518 = vmatprep.subr.mxu0 0.0
  %1519 = vmatpush1.msra.mxu0 %v1491
  %1520 = vmatprep.subr.mxu0 0.0
  %1521 = vmatpush1.msra.mxu0 %v1492
  %1522 = vmatprep.subr.mxu0 0.0
  %1523 = vmatpush1.msra.mxu0 %v1493
  %1524 = vmatprep.subr.mxu0 0.0
  %1525 = vmatpush1.msra.mxu0 %v1494
  %1526 = vmatprep.subr.mxu0 0.0
  %1527 = vmatpush1.msra.mxu0 %v1495
  %1528 = vmatprep.subr.mxu0 0.0
  %1529 = vmatpush1.msra.mxu0 %v1496
  %1530 = vmatprep.subr.mxu0 0.0
  %1531 = vmatpush1.msra.mxu0 %v1497
  %1532 = vmatprep.subr.mxu0 0.0
  %1533 = vmatpush1.msra.mxu0 %v1498
  %1534 = vmatprep.subr.mxu0 0.0
  %1535 = vmatpush1.msra.mxu0 %v1499
  %1536 = vmatprep.subr.mxu0 0.0
  %1537 = vmatpush1.msra.mxu0 %v1500
  %1538 = vmatprep.subr.mxu0 0.0
  %1539 = vmatpush1.msra.mxu0 %v1501
  %1540 = vmatprep.subr.mxu0 0.0
  %1541 = vmatpush1.msra.mxu0 %v1502
  %1542 = vmatprep.subr.mxu0 0.0
  %1543 = vmatpush1.msra.mxu0 0.0
  %1544 = vmatprep.subr.mxu0 0.0
  %1545 = vmatpush1.msra.mxu0 0.0
  %1546 = vmatprep.subr.mxu0 0.0
  %1547 = vmatpush1.msra.mxu0 0.0
  %1548 = vmatprep.subr.mxu0 0.0
  %1549 = vmatpush1.msra.mxu0 0.0
  %1550 = vmatprep.subr.mxu0 0.0
  %1551 = vmatpush1.msra.mxu0 0.0
  %1552 = vmatprep.subr.mxu0 0.0
  %1553 = vmatpush1.msra.mxu0 0.0
  %1554 = vmatprep.subr.mxu0 0.0
  %1555 = vmatpush1.msra.mxu0 0.0
  %1556 = vmatprep.subr.mxu0 0.0
  %1557 = vmatpush1.msra.mxu0 0.0
  %1558 = vmatprep.subr.mxu0 0.0
  %1559 = vmatpush1.msra.mxu0 0.0
  %1560 = vmatprep.subr.mxu0 0.0
  %1561 = vmatpush1.msra.mxu0 0.0
  %1562 = vmatprep.subr.mxu0 0.0
  %1563 = vmatpush1.msra.mxu0 0.0
  %1564 = vmatprep.subr.mxu0 0.0
  %1565 = vmatpush1.msra.mxu0 0.0
  %1566 = vmatprep.subr.mxu0 0.0
  %1567 = vmatpush1.msra.mxu0 0.0
  %1568 = vmatprep.subr.mxu0 0.0
  %1569 = vmatpush1.msra.mxu0 0.0
  %1570 = vmatprep.subr.mxu0 0.0
  %1571 = vmatpush1.msra.mxu0 0.0
  %1572 = vmatprep.subr.mxu0 0.0
  %1573 = vmatpush1.msra.mxu0 0.0
  %1574 = vmatprep.mubr.f32.mxu0 0.0
  %1575 = vmatmul.mubr.f32.gmra.mrb[0].mxu0 %v981
  %v1576 = vpop.f32.mrb[0].mxu0
  %v1577 = vadd.f32 %v1508, %v1576
  %v1578 = vpop.f32.mrb[0].mxu0
  %1579 = vmatprep.mubr.f32.mxu0 0.0
  %1580 = vmatmul.mubr.f32.gmra.mrb[0].mxu0 %v1053
  %v1581 = vpop.f32.mrb[0].mxu0
  %v1582 = vadd.f32 %v1508, %v1581
  %v1583 = vpop.f32.mrb[0].mxu0
  %1584 = vmatprep.mubr.f32.mxu0 0.0
  %1585 = vmatmul.mubr.f32.gmra.mrb[0].mxu0 %v1125
  %v1586 = vpop.f32.mrb[0].mxu0
  %v1587 = vadd.f32 %v1508, %v1586
  %v1588 = vpop.f32.mrb[0].mxu0
  %1589 = vmatprep.mubr.f32.mxu0 0.0
  %1590 = vmatmul.mubr.f32.gmra.mrb[0].mxu0 %v1197
  %v1591 = vpop.f32.mrb[0].mxu0
  %v1592 = vadd.f32 %v1508, %v1591
  %v1593 = vpop.f32.mrb[0].mxu0
  %1594 = vmatprep.mubr.f32.mxu0 0.0
  %1595 = vmatmul.mubr.f32.gmra.mrb[0].mxu0 %v1269
  %v1596 = vpop.f32.mrb[0].mxu0
  %v1597 = vadd.f32 %v1508, %v1596
  %v1598 = vpop.f32.mrb[0].mxu0
  %1599 = vmatprep.mubr.f32.mxu0 0.0
  %1600 = vmatmul.mubr.f32.gmra.mrb[0].mxu0 %v1341
  %v1601 = vpop.f32.mrb[0].mxu0
  %v1602 = vadd.f32 %v1508, %v1601
  %v1603 = vpop.f32.mrb[0].mxu0
  %1604 = vmatprep.mubr.f32.mxu0 0.0
  %1605 = vmatmul.mubr.f32.gmra.mrb[0].mxu0 %v1413
  %v1606 = vpop.f32.mrb[0].mxu0
  %v1607 = vadd.f32 %v1508, %v1606
  %v1608 = vpop.f32.mrb[0].mxu0
  %1609 = vmatprep.mubr.f32.mxu0 0.0
  %1610 = vmatmul.mubr.f32.gmra.mrb[0].mxu0 %v1485
  %v1611 = vpop.f32.mrb[0].mxu0
  %v1612 = vadd.f32 %v1508, %v1611
  %v1613 = vpop.f32.mrb[0].mxu0
  %1614 = vdwg.mxu0
  %1615 = vst [vmem:[%s7] sm:$0xff] %v1577
  %1616 = vst [vmem:[%s7 + $0x8] sm:$0xff] %v1582
  %1617 = vst [vmem:[%s7 + $0x10] sm:$0xff] %v1587
  %1618 = vst [vmem:[%s7 + $0x18] sm:$0xff] %v1592
  %1619 = vst [vmem:[%s7 + $0x20] sm:$0xff] %v1597
  %1620 = vst [vmem:[%s7 + $0x28] sm:$0xff] %v1602
  %1621 = vst [vmem:[%s7 + $0x30] sm:$0xff] %v1607
  %1622 = vst [vmem:[%s7 + $0x38] sm:$0xff] %v1612
  // Predicated region
  $region34: #{rnn_forward.1} parent=0 // pred_check
    _
  $region35: #{rnn_forward.1} parent=0 // pred_check_branch
    %1624 = sbr.rel (0) target = $region37
  $region36: #{rnn_forward.1} parent=0 // pred_region
    _
  $region37: #{rnn_forward.1} parent=0 // pred_fallthru
    _
  // Predicated region
  $region38: #{rnn_forward.1} parent=0 // pred_check
    _
  $region39: #{rnn_forward.1} parent=0 // pred_check_branch
    %1626 = sbr.rel (0) target = $region41
  $region40: #{rnn_forward.1} parent=0 // pred_region
    _
  $region41: #{rnn_forward.1} parent=0 // pred_fallthru
    _

</llo_original>
